<compile_context>
chip_gen: v6e
topology: v6e:2x2x1
jax: 0.10.0
libtpu: 0.0.40
codegen_flags: <defaults>
</compile_context>

<pallas_src>
import functools

import jax
import jax.numpy as jnp
from jax.experimental import pallas as pl
from jax.experimental.pallas import tpu as pltpu

EXPANSION = 4
BN_EPS = 1e-5


# --------------------------------------------------------------------------- #
# Pallas kernel: one grid step == NB batch samples, fully fused bottleneck.
# --------------------------------------------------------------------------- #
def _bottleneck_kernel(*refs, stride, has_shortcut):
    it = iter(refs)
    x_ref = next(it)      # (NB, Cin, L)   matmul_dtype
    edge_ref = next(it)   # (2, NB*L)      f32 0/1 masks (left / right sample edges)
    w1_ref = next(it)     # (C, Cin)       BN1-scale folded, matmul_dtype
    b1_ref = next(it)     # (C, 1)         f32
    w2_ref = next(it)     # (C, 3C)        BN2-scale folded, taps fused on K
    b2_ref = next(it)     # (C, 1)         f32
    w3_ref = next(it)     # (C4, C)        BN3-scale folded
    b3_ref = next(it)     # (C4, 1)        f32
    sel_ref = next(it) if stride > 1 else None      # (NB*L, NB*L_out) 0/1
    if has_shortcut:
        ws_ref = next(it)                            # (C4, Cin) BNs-scale folded
        bs_ref = next(it)                            # (C4, 1)   f32
    o_ref = next(it)      # (NB, C4, L_out)

    nb, _, l_out = o_ref.shape

    # Fold the batch block onto the lane axis: (NB, Cin, L) -> (Cin, NB*L).
    if nb > 1:
        z = jnp.concatenate([x_ref[b] for b in range(nb)], axis=1)
    else:
        z = x_ref[0]

    # --- conv1: k=1 (channel matmul) + folded-BN bias + ReLU ------------------
    h1 = jnp.dot(w1_ref[...], z, preferred_element_type=jnp.float32) + b1_ref[...]
    h1 = jnp.maximum(h1, 0.0)                                   # (C, NB*L) f32

    # --- conv2: k=3, pad=1 as ONE wide-K matmul -------------------------------
    # Lane-rolled copies give h1[:, l-1] / h1[:, l+1]; the precomputed edge masks
    # zero the columns that wrapped across a sample boundary (== zero padding).
    nbl = h1.shape[1]
    h_m1 = pltpu.roll(h1, shift=1, axis=1) * edge_ref[0:1, :]        # h1[:, l-1]
    h_p1 = pltpu.roll(h1, shift=nbl - 1, axis=1) * edge_ref[1:2, :]  # h1[:, l+1]
    h_cat = jnp.concatenate([h_m1, h1, h_p1], axis=0).astype(w2_ref.dtype)  # (3C, NB*L)
    acc2 = jnp.dot(w2_ref[...], h_cat, preferred_element_type=jnp.float32)

    if stride > 1:
        # Exact 0/1 block-diagonal selection (precomputed, matmul_dtype) for the
        # lane-strided downsample of both the residual and the shortcut input.
        sel = sel_ref[...]
        acc2 = jnp.dot(acc2.astype(sel.dtype), sel,
                       preferred_element_type=jnp.float32)
        xs = jnp.dot(z, sel, preferred_element_type=z.dtype)     # matmul_dtype
    else:
        xs = z

    h2 = jnp.maximum(acc2 + b2_ref[...], 0.0).astype(w3_ref.dtype)   # (C, NB*L_out)

    # --- conv3: k=1 + folded-BN bias ------------------------------------------
    h3 = jnp.dot(w3_ref[...], h2, preferred_element_type=jnp.float32) + b3_ref[...]

    # --- shortcut: projection conv k=1 stride=s + folded-BN bias, or identity -
    if has_shortcut:
        sc = jnp.dot(ws_ref[...], xs.astype(ws_ref.dtype),
                     preferred_element_type=jnp.float32) + bs_ref[...]
    else:
        # TODO(synk): identity residual is added in matmul_dtype; PyTorch adds it
        # at the input precision.
        sc = xs

    y = jnp.maximum(h3 + sc, 0.0).astype(o_ref.dtype)                # (C4, NB*L_out)

    # Unfold the batch block from the lane axis and store (static lane slices).
    for b in range(nb):
        o_ref[b] = y[:, b * l_out:(b + 1) * l_out]


# --------------------------------------------------------------------------- #
# Wrapper: BN folding into weights, batch blocking, BlockSpecs, grid.
# --------------------------------------------------------------------------- #
def _fold_bn(gamma, beta, mean, var):
    scale = gamma / jnp.sqrt(var + BN_EPS)
    bias = beta - mean * scale
    return scale[:, None].astype(jnp.float32), bias[:, None].astype(jnp.float32)


def _pick_batch_block(n, l, *, max_lanes=2048, max_block=8):
    """Largest divisor of n (<= max_block) keeping the fused lane axis <= max_lanes."""
    best = 1
    for cand in range(1, min(n, max_block) + 1):
        if n % cand == 0 and cand * l <= max_lanes:
            best = cand
    return best


def bottleneck_forward(x_ncl, params, *, stride=1, matmul_dtype=jnp.bfloat16,
                       out_dtype=None, batch_block=None, vmem_limit_bytes=None):
    """Fused BottleNeck forward: (N, Cin, L) -> (N, 4*C, L // stride)."""
    N, Cin, L = x_ncl.shape
    C = params['w1'].shape[0]
    C4 = params['w3'].shape[0]
    assert C4 == C * EXPANSION
    # TODO(synk): PyTorch k=3/pad=1/stride=s gives floor((L-1)/s)+1 outputs; only
    # the stride-divides-L case (== L // s) is supported here.
    assert L % stride == 0
    L_out = L // stride
    has_shortcut = (stride != 1) or (Cin != C4)
    out_dtype = x_ncl.dtype if out_dtype is None else out_dtype

    NB = batch_block if batch_block is not None else _pick_batch_block(N, L)
    assert N % NB == 0, "batch_block must divide the batch size"

    # Fold eval-mode BN (running stats) into per-output-channel weight scale + bias.
    # TODO(synk): training-mode BatchNorm (batch statistics) is not representable here.
    s1, b1 = _fold_bn(*params['bn1'])
    s2, b2 = _fold_bn(*params['bn2'])
    s3, b3 = _fold_bn(*params['bn3'])

    w1 = (s1 * params['w1']).astype(matmul_dtype)                          # (C, Cin)
    w2 = jnp.transpose(params['w2'], (0, 2, 1)).reshape(C, 3 * C)          # taps -> wide K
    w2 = (s2 * w2).astype(matmul_dtype)                                    # (C, 3C)
    w3 = (s3 * params['w3']).astype(matmul_dtype)                          # (C4, C)
    x = x_ncl.astype(matmul_dtype)                                         # (N, Cin, L)

    # Per-sample zero-padding masks on the fused lane axis (left / right edges).
    pos = jnp.arange(NB * L)
    edge = jnp.stack([(pos % L) != 0, (pos % L) != (L - 1)]).astype(jnp.float32)

    operands = [x, edge, w1, b1, w2, b2, w3, b3]
    const_shapes = [edge.shape, w1.shape, b1.shape, w2.shape, b2.shape,
                    w3.shape, b3.shape]

    if stride > 1:
        rows = jnp.arange(NB * L)[:, None]
        cols = jnp.arange(NB * L_out)[None, :]
        src = (cols // L_out) * L + (cols % L_out) * stride
        sel = (rows == src).astype(matmul_dtype)                           # block-diagonal
        operands.append(sel)
        const_shapes.append(sel.shape)

    if has_shortcut:   # only DMA the projection weights when they are used
        ss, bs = _fold_bn(*params['bns'])
        ws = (ss * params['ws']).astype(matmul_dtype)                      # (C4, Cin)
        operands += [ws, bs]
        const_shapes += [ws.shape, bs.shape]

    kernel = functools.partial(_bottleneck_kernel, stride=stride,
                               has_shortcut=has_shortcut)

    def build(single_buffer_consts):
        def const_spec(shape):
            nd = len(shape)
            idx = lambda b, _nd=nd: (0,) * _nd
            if single_buffer_consts:
                # Constant index_map => no pipelining hazard; drop the duplicate buffer.
                return pl.BlockSpec(shape, idx, pipeline_mode=pl.Buffered(1))
            return pl.BlockSpec(shape, idx)

        in_specs = [pl.BlockSpec((NB, Cin, L), lambda b: (b, 0, 0))]
        in_specs += [const_spec(s) for s in const_shapes]

        cp_kwargs = dict(dimension_semantics=("parallel",))
        if vmem_limit_bytes is not None:
            cp_kwargs["vmem_limit_bytes"] = vmem_limit_bytes

        return pl.pallas_call(
            kernel,
            out_shape=jax.ShapeDtypeStruct((N, C4, L_out), out_dtype),
            grid=(N // NB,),
            in_specs=in_specs,
            out_specs=pl.BlockSpec((NB, C4, L_out), lambda b: (b, 0, 0)),
            compiler_params=pltpu.CompilerParams(**cp_kwargs),
        )(*operands)

    try:
        return build(True)
    except Exception:
        # Fallback for JAX versions that reject pipeline_mode / Buffered(1).
        return build(False)


# --------------------------------------------------------------------------- #
# Pure-JAX reference (lax.conv) for numerical validation.
# --------------------------------------------------------------------------- #
def _ref_forward(x_ncl, params, *, stride=1):
    def conv1d(x, w, s, pad):
        return jax.lax.conv_general_dilated(
            x, w, window_strides=(s,), padding=[(pad, pad)],
            dimension_numbers=('NCH', 'OIH', 'NCH'),
            precision=jax.lax.Precision.HIGHEST)

    def bn(x, gamma, beta, mean, var):
        inv = 1.0 / jnp.sqrt(var + BN_EPS)
        return (x - mean[None, :, None]) * inv[None, :, None] * \
            gamma[None, :, None] + beta[None, :, None]

    C4 = params['w3'].shape[0]
    has_shortcut = (stride != 1) or (x_ncl.shape[1] != C4)

    w1 = params['w1'][:, :, None]                 # (C, Cin, 1)
    w2 = params['w2']                             # (C, C, 3)
    w3 = params['w3'][:, :, None]                 # (4C, C, 1)

    h = jax.nn.relu(bn(conv1d(x_ncl, w1, 1, 0), *params['bn1']))
    h = jax.nn.relu(bn(conv1d(h, w2, stride, 1), *params['bn2']))
    h = bn(conv1d(h, w3, 1, 0), *params['bn3'])
    if has_shortcut:
        ws = params['ws'][:, :, None]             # (4C, Cin, 1)
        s = bn(conv1d(x_ncl, ws, stride, 0), *params['bns'])
    else:
        s = x_ncl
    return jax.nn.relu(h + s)


# --------------------------------------------------------------------------- #
def _make_params(key, in_channels, out_channels):
    C, C4 = out_channels, out_channels * EXPANSION
    ks = jax.random.split(key, 8)

    def bn_params(k, ch):
        k0, k1, k2, k3 = jax.random.split(k, 4)
        gamma = jax.random.uniform(k0, (ch,), jnp.float32, 0.5, 1.5)
        beta = 0.1 * jax.random.normal(k1, (ch,), jnp.float32)
        mean = 0.1 * jax.random.normal(k2, (ch,), jnp.float32)
        var = jax.random.uniform(k3, (ch,), jnp.float32, 0.5, 1.5)
        return (gamma, beta, mean, var)

    return {
        'w1': 0.3 * jax.random.normal(ks[0], (C, in_channels), jnp.float32),
        'bn1': bn_params(ks[1], C),
        'w2': 0.3 * jax.random.normal(ks[2], (C, C, 3), jnp.float32),
        'bn2': bn_params(ks[3], C),
        'w3': 0.3 * jax.random.normal(ks[4], (C4, C), jnp.float32),
        'bn3': bn_params(ks[5], C4),
        'ws': 0.3 * jax.random.normal(ks[6], (C4, in_channels), jnp.float32),
        'bns': bn_params(ks[7], C4),
    }


if __name__ == "__main__":
    key = jax.random.PRNGKey(0)

    # (N, Cin, L, out_channels, stride, matmul_dtype, rtol, atol)
    configs = [
        (4,  8, 128, 8, 1, jnp.float32, 1e-3, 1e-3),   # projection shortcut, NB=4 (512 lanes)
        (4,  8, 128, 8, 2, jnp.float32, 1e-3, 1e-3),   # strided conv2 + strided shortcut
        (2, 32, 128, 8, 1, jnp.float32, 1e-3, 1e-3),   # identity shortcut (shortcut DMA skipped)
        (4,  8, 128, 8, 1, jnp.bfloat16, 5e-2, 1e-1),  # default bf16 MXU path, f32 accumulate
        (2,  8, 128, 8, 2, jnp.bfloat16, 5e-2, 1e-1),  # bf16 + stride 2
    ]

    for idx, (N, Cin, L, C, stride, mmdt, rtol, atol) in enumerate(configs):
        k_x, k_p = jax.random.split(jax.random.fold_in(key, idx))
        x = jax.random.normal(k_x, (N, Cin, L), jnp.float32)
        params = _make_params(k_p, Cin, C)

        out = jax.block_until_ready(
            bottleneck_forward(x, params, stride=stride, matmul_dtype=mmdt))
        ref = _ref_forward(x, params, stride=stride)

        assert out.shape == ref.shape == (N, C * EXPANSION, L // stride)
        out_f32 = out.astype(jnp.float32)
        err = float(jnp.max(jnp.abs(out_f32 - ref)))
        assert jnp.allclose(out_f32, ref, rtol=rtol, atol=atol), \
            f"config {idx}: max abs err {err}"

    print("KERNEL_OK")
</pallas_src>

<mosaic_0001>
module attributes {stable_mosaic.version = 11 : i64} {
  func.func @_bottleneck_kernel(%arg0: i32, %arg1: memref<4x8x128xf32, #tpu.memory_space<vmem>>, %arg2: memref<2x512xf32, #tpu.memory_space<vmem>>, %arg3: memref<8x8xf32, #tpu.memory_space<vmem>>, %arg4: memref<8x1xf32, #tpu.memory_space<vmem>>, %arg5: memref<8x24xf32, #tpu.memory_space<vmem>>, %arg6: memref<8x1xf32, #tpu.memory_space<vmem>>, %arg7: memref<32x8xf32, #tpu.memory_space<vmem>>, %arg8: memref<32x1xf32, #tpu.memory_space<vmem>>, %arg9: memref<32x8xf32, #tpu.memory_space<vmem>>, %arg10: memref<32x1xf32, #tpu.memory_space<vmem>>, %arg11: memref<4x32x128xf32, #tpu.memory_space<vmem>>) attributes {dimension_semantics = [#tpu.dimension_semantics<parallel>], iteration_bounds = array<i64: 1>, scalar_prefetch = 0 : i64, scratch_operands = 0 : i64, tpu.core_type = #tpu.core_type<tc>, window_params = [{transform_indices = @transform_0, window_bounds = array<i64: 4, 8, 128>}, {pipeline_mode = #tpu.pipeline_mode<synchronous>, transform_indices = @transform_1, window_bounds = array<i64: 2, 512>}, {pipeline_mode = #tpu.pipeline_mode<synchronous>, transform_indices = @transform_2, window_bounds = array<i64: 8, 8>}, {pipeline_mode = #tpu.pipeline_mode<synchronous>, transform_indices = @transform_3, window_bounds = array<i64: 8, 1>}, {pipeline_mode = #tpu.pipeline_mode<synchronous>, transform_indices = @transform_4, window_bounds = array<i64: 8, 24>}, {pipeline_mode = #tpu.pipeline_mode<synchronous>, transform_indices = @transform_5, window_bounds = array<i64: 8, 1>}, {pipeline_mode = #tpu.pipeline_mode<synchronous>, transform_indices = @transform_6, window_bounds = array<i64: 32, 8>}, {pipeline_mode = #tpu.pipeline_mode<synchronous>, transform_indices = @transform_7, window_bounds = array<i64: 32, 1>}, {pipeline_mode = #tpu.pipeline_mode<synchronous>, transform_indices = @transform_8, window_bounds = array<i64: 32, 8>}, {pipeline_mode = #tpu.pipeline_mode<synchronous>, transform_indices = @transform_9, window_bounds = array<i64: 32, 1>}, {transform_indices = @transform_10, window_bounds = array<i64: 4, 32, 128>}]} {
    %c0 = arith.constant 0 : index
    %c0_0 = arith.constant 0 : index
    %c0_1 = arith.constant 0 : index
    %0 = vector.load %arg1[%c0, %c0_0, %c0_1] : memref<4x8x128xf32, #tpu.memory_space<vmem>>, vector<1x8x128xf32>
    %1 = vector.shape_cast %0 : vector<1x8x128xf32> to vector<8x128xf32>
    %c1 = arith.constant 1 : index
    %c0_2 = arith.constant 0 : index
    %c0_3 = arith.constant 0 : index
    %2 = vector.load %arg1[%c1, %c0_2, %c0_3] : memref<4x8x128xf32, #tpu.memory_space<vmem>>, vector<1x8x128xf32>
    %3 = vector.shape_cast %2 : vector<1x8x128xf32> to vector<8x128xf32>
    %c2 = arith.constant 2 : index
    %c0_4 = arith.constant 0 : index
    %c0_5 = arith.constant 0 : index
    %4 = vector.load %arg1[%c2, %c0_4, %c0_5] : memref<4x8x128xf32, #tpu.memory_space<vmem>>, vector<1x8x128xf32>
    %5 = vector.shape_cast %4 : vector<1x8x128xf32> to vector<8x128xf32>
    %c3 = arith.constant 3 : index
    %c0_6 = arith.constant 0 : index
    %c0_7 = arith.constant 0 : index
    %6 = vector.load %arg1[%c3, %c0_6, %c0_7] : memref<4x8x128xf32, #tpu.memory_space<vmem>>, vector<1x8x128xf32>
    %7 = vector.shape_cast %6 : vector<1x8x128xf32> to vector<8x128xf32>
    %8 = tpu.concatenate %1, %3, %5, %7 in 1 : vector<8x128xf32>, vector<8x128xf32>, vector<8x128xf32>, vector<8x128xf32> -> vector<8x512xf32>
    %c0_8 = arith.constant 0 : index
    %c0_9 = arith.constant 0 : index
    %9 = vector.load %arg3[%c0_8, %c0_9] : memref<8x8xf32, #tpu.memory_space<vmem>>, vector<8x8xf32>
    %cst = arith.constant dense<0.000000e+00> : vector<8x512xf32>
    %10 = tpu.matmul %9, %8, %cst {dimension_numbers = #tpu.dot_dimension_numbers<[1], [0], [0], [1], [0, 0, 1, 1], [], []>} : vector<8x8xf32>, vector<8x512xf32>, vector<8x512xf32> -> vector<8x512xf32>
    %c0_10 = arith.constant 0 : index
    %c0_11 = arith.constant 0 : index
    %11 = vector.load %arg4[%c0_10, %c0_11] : memref<8x1xf32, #tpu.memory_space<vmem>>, vector<8x1xf32>
    %12 = vector.broadcast %11 : vector<8x1xf32> to vector<8x512xf32>
    %13 = arith.addf %10, %12 : vector<8x512xf32>
    %cst_12 = arith.constant 0.000000e+00 : f32
    %14 = vector.broadcast %cst_12 : f32 to vector<8x512xf32>
    %15 = arith.maximumf %13, %14 : vector<8x512xf32>
    %c1_i32 = arith.constant 1 : i32
    %16 = tpu.dynamic_rotate %15 by %c1_i32 dim 1 : vector<8x512xf32>, i32 -> vector<8x512xf32>
    %c0_13 = arith.constant 0 : index
    %c0_14 = arith.constant 0 : index
    %17 = vector.load %arg2[%c0_13, %c0_14] : memref<2x512xf32, #tpu.memory_space<vmem>>, vector<1x512xf32>
    %18 = vector.broadcast %17 : vector<1x512xf32> to vector<8x512xf32>
    %19 = arith.mulf %16, %18 : vector<8x512xf32>
    %c511_i32 = arith.constant 511 : i32
    %20 = tpu.dynamic_rotate %15 by %c511_i32 dim 1 : vector<8x512xf32>, i32 -> vector<8x512xf32>
    %c1_15 = arith.constant 1 : index
    %c0_16 = arith.constant 0 : index
    %21 = vector.load %arg2[%c1_15, %c0_16] : memref<2x512xf32, #tpu.memory_space<vmem>>, vector<1x512xf32>
    %22 = vector.broadcast %21 : vector<1x512xf32> to vector<8x512xf32>
    %23 = arith.mulf %20, %22 : vector<8x512xf32>
    %24 = tpu.concatenate %19, %15, %23 in 0 : vector<8x512xf32>, vector<8x512xf32>, vector<8x512xf32> -> vector<24x512xf32>
    %c0_17 = arith.constant 0 : index
    %c0_18 = arith.constant 0 : index
    %25 = vector.load %arg5[%c0_17, %c0_18] : memref<8x24xf32, #tpu.memory_space<vmem>>, vector<8x24xf32>
    %cst_19 = arith.constant dense<0.000000e+00> : vector<8x512xf32>
    %26 = tpu.matmul %25, %24, %cst_19 {dimension_numbers = #tpu.dot_dimension_numbers<[1], [0], [0], [1], [0, 0, 1, 1], [], []>} : vector<8x24xf32>, vector<24x512xf32>, vector<8x512xf32> -> vector<8x512xf32>
    %c0_20 = arith.constant 0 : index
    %c0_21 = arith.constant 0 : index
    %27 = vector.load %arg6[%c0_20, %c0_21] : memref<8x1xf32, #tpu.memory_space<vmem>>, vector<8x1xf32>
    %28 = vector.broadcast %27 : vector<8x1xf32> to vector<8x512xf32>
    %29 = arith.addf %26, %28 : vector<8x512xf32>
    %cst_22 = arith.constant 0.000000e+00 : f32
    %30 = vector.broadcast %cst_22 : f32 to vector<8x512xf32>
    %31 = arith.maximumf %29, %30 : vector<8x512xf32>
    %c0_23 = arith.constant 0 : index
    %c0_24 = arith.constant 0 : index
    %32 = vector.load %arg7[%c0_23, %c0_24] : memref<32x8xf32, #tpu.memory_space<vmem>>, vector<32x8xf32>
    %cst_25 = arith.constant dense<0.000000e+00> : vector<32x512xf32>
    %33 = tpu.matmul %32, %31, %cst_25 {dimension_numbers = #tpu.dot_dimension_numbers<[1], [0], [0], [1], [0, 0, 1, 1], [], []>} : vector<32x8xf32>, vector<8x512xf32>, vector<32x512xf32> -> vector<32x512xf32>
    %c0_26 = arith.constant 0 : index
    %c0_27 = arith.constant 0 : index
    %34 = vector.load %arg8[%c0_26, %c0_27] : memref<32x1xf32, #tpu.memory_space<vmem>>, vector<32x1xf32>
    %35 = vector.broadcast %34 : vector<32x1xf32> to vector<32x512xf32>
    %36 = arith.addf %33, %35 : vector<32x512xf32>
    %c0_28 = arith.constant 0 : index
    %c0_29 = arith.constant 0 : index
    %37 = vector.load %arg9[%c0_28, %c0_29] : memref<32x8xf32, #tpu.memory_space<vmem>>, vector<32x8xf32>
    %cst_30 = arith.constant dense<0.000000e+00> : vector<32x512xf32>
    %38 = tpu.matmul %37, %8, %cst_30 {dimension_numbers = #tpu.dot_dimension_numbers<[1], [0], [0], [1], [0, 0, 1, 1], [], []>} : vector<32x8xf32>, vector<8x512xf32>, vector<32x512xf32> -> vector<32x512xf32>
    %c0_31 = arith.constant 0 : index
    %c0_32 = arith.constant 0 : index
    %39 = vector.load %arg10[%c0_31, %c0_32] : memref<32x1xf32, #tpu.memory_space<vmem>>, vector<32x1xf32>
    %40 = vector.broadcast %39 : vector<32x1xf32> to vector<32x512xf32>
    %41 = arith.addf %38, %40 : vector<32x512xf32>
    %42 = arith.addf %36, %41 : vector<32x512xf32>
    %cst_33 = arith.constant 0.000000e+00 : f32
    %43 = vector.broadcast %cst_33 : f32 to vector<32x512xf32>
    %44 = arith.maximumf %42, %43 : vector<32x512xf32>
    %45 = vector.extract_strided_slice %44 {offsets = [0, 0], sizes = [32, 128], strides = [1, 1]} : vector<32x512xf32> to vector<32x128xf32>
    %c0_34 = arith.constant 0 : index
    %c0_35 = arith.constant 0 : index
    %c0_36 = arith.constant 0 : index
    %46 = vector.load %arg11[%c0_34, %c0_35, %c0_36] : memref<4x32x128xf32, #tpu.memory_space<vmem>>, vector<1x32x128xf32>
    %47 = vector.shape_cast %46 : vector<1x32x128xf32> to vector<32x128xf32>
    %48 = vector.shape_cast %45 : vector<32x128xf32> to vector<1x32x128xf32>
    tpu.vector_store %arg11[%c0_34, %c0_35, %c0_36], %48 {strides = array<i32>} : memref<4x32x128xf32, #tpu.memory_space<vmem>>, vector<1x32x128xf32>,
    %49 = vector.extract_strided_slice %44 {offsets = [0, 128], sizes = [32, 128], strides = [1, 1]} : vector<32x512xf32> to vector<32x128xf32>
    %c1_37 = arith.constant 1 : index
    %c0_38 = arith.constant 0 : index
    %c0_39 = arith.constant 0 : index
    %50 = vector.load %arg11[%c1_37, %c0_38, %c0_39] : memref<4x32x128xf32, #tpu.memory_space<vmem>>, vector<1x32x128xf32>
    %51 = vector.shape_cast %50 : vector<1x32x128xf32> to vector<32x128xf32>
    %52 = vector.shape_cast %49 : vector<32x128xf32> to vector<1x32x128xf32>
    tpu.vector_store %arg11[%c1_37, %c0_38, %c0_39], %52 {strides = array<i32>} : memref<4x32x128xf32, #tpu.memory_space<vmem>>, vector<1x32x128xf32>,
    %53 = vector.extract_strided_slice %44 {offsets = [0, 256], sizes = [32, 128], strides = [1, 1]} : vector<32x512xf32> to vector<32x128xf32>
    %c2_40 = arith.constant 2 : index
    %c0_41 = arith.constant 0 : index
    %c0_42 = arith.constant 0 : index
    %54 = vector.load %arg11[%c2_40, %c0_41, %c0_42] : memref<4x32x128xf32, #tpu.memory_space<vmem>>, vector<1x32x128xf32>
    %55 = vector.shape_cast %54 : vector<1x32x128xf32> to vector<32x128xf32>
    %56 = vector.shape_cast %53 : vector<32x128xf32> to vector<1x32x128xf32>
    tpu.vector_store %arg11[%c2_40, %c0_41, %c0_42], %56 {strides = array<i32>} : memref<4x32x128xf32, #tpu.memory_space<vmem>>, vector<1x32x128xf32>,
    %57 = vector.extract_strided_slice %44 {offsets = [0, 384], sizes = [32, 128], strides = [1, 1]} : vector<32x512xf32> to vector<32x128xf32>
    %c3_43 = arith.constant 3 : index
    %c0_44 = arith.constant 0 : index
    %c0_45 = arith.constant 0 : index
    %58 = vector.load %arg11[%c3_43, %c0_44, %c0_45] : memref<4x32x128xf32, #tpu.memory_space<vmem>>, vector<1x32x128xf32>
    %59 = vector.shape_cast %58 : vector<1x32x128xf32> to vector<32x128xf32>
    %60 = vector.shape_cast %57 : vector<32x128xf32> to vector<1x32x128xf32>
    tpu.vector_store %arg11[%c3_43, %c0_44, %c0_45], %60 {strides = array<i32>} : memref<4x32x128xf32, #tpu.memory_space<vmem>>, vector<1x32x128xf32>,
    return
  }
  func.func @transform_0(%arg0: i32) -> (i32, i32, i32) {
    %c0_i32 = arith.constant 0 : i32
    %c0_i32_0 = arith.constant 0 : i32
    %c0_i32_1 = arith.constant 0 : i32
    return %arg0, %c0_i32, %c0_i32_0 : i32, i32, i32
  }
  func.func @transform_1(%arg0: i32) -> (i32, i32) {
    %c0_i32 = arith.constant 0 : i32
    %c0_i32_0 = arith.constant 0 : i32
    %c0_i32_1 = arith.constant 0 : i32
    return %c0_i32, %c0_i32_0 : i32, i32
  }
  func.func @transform_2(%arg0: i32) -> (i32, i32) {
    %c0_i32 = arith.constant 0 : i32
    %c0_i32_0 = arith.constant 0 : i32
    %c0_i32_1 = arith.constant 0 : i32
    return %c0_i32, %c0_i32_0 : i32, i32
  }
  func.func @transform_3(%arg0: i32) -> (i32, i32) {
    %c0_i32 = arith.constant 0 : i32
    %c0_i32_0 = arith.constant 0 : i32
    %c0_i32_1 = arith.constant 0 : i32
    return %c0_i32, %c0_i32_0 : i32, i32
  }
  func.func @transform_4(%arg0: i32) -> (i32, i32) {
    %c0_i32 = arith.constant 0 : i32
    %c0_i32_0 = arith.constant 0 : i32
    %c0_i32_1 = arith.constant 0 : i32
    return %c0_i32, %c0_i32_0 : i32, i32
  }
  func.func @transform_5(%arg0: i32) -> (i32, i32) {
    %c0_i32 = arith.constant 0 : i32
    %c0_i32_0 = arith.constant 0 : i32
    %c0_i32_1 = arith.constant 0 : i32
    return %c0_i32, %c0_i32_0 : i32, i32
  }
  func.func @transform_6(%arg0: i32) -> (i32, i32) {
    %c0_i32 = arith.constant 0 : i32
    %c0_i32_0 = arith.constant 0 : i32
    %c0_i32_1 = arith.constant 0 : i32
    return %c0_i32, %c0_i32_0 : i32, i32
  }
  func.func @transform_7(%arg0: i32) -> (i32, i32) {
    %c0_i32 = arith.constant 0 : i32
    %c0_i32_0 = arith.constant 0 : i32
    %c0_i32_1 = arith.constant 0 : i32
    return %c0_i32, %c0_i32_0 : i32, i32
  }
  func.func @transform_8(%arg0: i32) -> (i32, i32) {
    %c0_i32 = arith.constant 0 : i32
    %c0_i32_0 = arith.constant 0 : i32
    %c0_i32_1 = arith.constant 0 : i32
    return %c0_i32, %c0_i32_0 : i32, i32
  }
  func.func @transform_9(%arg0: i32) -> (i32, i32) {
    %c0_i32 = arith.constant 0 : i32
    %c0_i32_0 = arith.constant 0 : i32
    %c0_i32_1 = arith.constant 0 : i32
    return %c0_i32, %c0_i32_0 : i32, i32
  }
  func.func @transform_10(%arg0: i32) -> (i32, i32, i32) {
    %c0_i32 = arith.constant 0 : i32
    %c0_i32_0 = arith.constant 0 : i32
    %c0_i32_1 = arith.constant 0 : i32
    return %arg0, %c0_i32, %c0_i32_0 : i32, i32, i32
  }
}

module attributes {stable_mosaic.version = 11 : i64} {
  func.func @_bottleneck_kernel(%arg0: i32, %arg1: memref<4x8x128xf32, #tpu.memory_space<vmem>>, %arg2: memref<2x512xf32, #tpu.memory_space<vmem>>, %arg3: memref<8x8xf32, #tpu.memory_space<vmem>>, %arg4: memref<8x1xf32, #tpu.memory_space<vmem>>, %arg5: memref<8x24xf32, #tpu.memory_space<vmem>>, %arg6: memref<8x1xf32, #tpu.memory_space<vmem>>, %arg7: memref<32x8xf32, #tpu.memory_space<vmem>>, %arg8: memref<32x1xf32, #tpu.memory_space<vmem>>, %arg9: memref<32x8xf32, #tpu.memory_space<vmem>>, %arg10: memref<32x1xf32, #tpu.memory_space<vmem>>, %arg11: memref<4x32x128xf32, #tpu.memory_space<vmem>>) attributes {dimension_semantics = [#tpu.dimension_semantics<parallel>], iteration_bounds = array<i64: 1>, scalar_prefetch = 0 : i64, scratch_operands = 0 : i64, tpu.core_type = #tpu.core_type<tc>, window_params = [{transform_indices = @transform_0, window_bounds = array<i64: 4, 8, 128>}, {pipeline_mode = #tpu.pipeline_mode<synchronous>, transform_indices = @transform_1, window_bounds = array<i64: 2, 512>}, {pipeline_mode = #tpu.pipeline_mode<synchronous>, transform_indices = @transform_2, window_bounds = array<i64: 8, 8>}, {pipeline_mode = #tpu.pipeline_mode<synchronous>, transform_indices = @transform_3, window_bounds = array<i64: 8, 1>}, {pipeline_mode = #tpu.pipeline_mode<synchronous>, transform_indices = @transform_4, window_bounds = array<i64: 8, 24>}, {pipeline_mode = #tpu.pipeline_mode<synchronous>, transform_indices = @transform_5, window_bounds = array<i64: 8, 1>}, {pipeline_mode = #tpu.pipeline_mode<synchronous>, transform_indices = @transform_6, window_bounds = array<i64: 32, 8>}, {pipeline_mode = #tpu.pipeline_mode<synchronous>, transform_indices = @transform_7, window_bounds = array<i64: 32, 1>}, {pipeline_mode = #tpu.pipeline_mode<synchronous>, transform_indices = @transform_8, window_bounds = array<i64: 32, 8>}, {pipeline_mode = #tpu.pipeline_mode<synchronous>, transform_indices = @transform_9, window_bounds = array<i64: 32, 1>}, {transform_indices = @transform_10, window_bounds = array<i64: 4, 32, 128>}]} {
    %c0 = arith.constant 0 : index
    %c0_0 = arith.constant 0 : index
    %c0_1 = arith.constant 0 : index
    %0 = vector.load %arg1[%c0, %c0_0, %c0_1] : memref<4x8x128xf32, #tpu.memory_space<vmem>>, vector<1x8x128xf32>
    %1 = vector.shape_cast %0 : vector<1x8x128xf32> to vector<8x128xf32>
    %c1 = arith.constant 1 : index
    %c0_2 = arith.constant 0 : index
    %c0_3 = arith.constant 0 : index
    %2 = vector.load %arg1[%c1, %c0_2, %c0_3] : memref<4x8x128xf32, #tpu.memory_space<vmem>>, vector<1x8x128xf32>
    %3 = vector.shape_cast %2 : vector<1x8x128xf32> to vector<8x128xf32>
    %c2 = arith.constant 2 : index
    %c0_4 = arith.constant 0 : index
    %c0_5 = arith.constant 0 : index
    %4 = vector.load %arg1[%c2, %c0_4, %c0_5] : memref<4x8x128xf32, #tpu.memory_space<vmem>>, vector<1x8x128xf32>
    %5 = vector.shape_cast %4 : vector<1x8x128xf32> to vector<8x128xf32>
    %c3 = arith.constant 3 : index
    %c0_6 = arith.constant 0 : index
    %c0_7 = arith.constant 0 : index
    %6 = vector.load %arg1[%c3, %c0_6, %c0_7] : memref<4x8x128xf32, #tpu.memory_space<vmem>>, vector<1x8x128xf32>
    %7 = vector.shape_cast %6 : vector<1x8x128xf32> to vector<8x128xf32>
    %8 = tpu.concatenate %1, %3, %5, %7 in 1 : vector<8x128xf32>, vector<8x128xf32>, vector<8x128xf32>, vector<8x128xf32> -> vector<8x512xf32>
    %c0_8 = arith.constant 0 : index
    %c0_9 = arith.constant 0 : index
    %9 = vector.load %arg3[%c0_8, %c0_9] : memref<8x8xf32, #tpu.memory_space<vmem>>, vector<8x8xf32>
    %cst = arith.constant dense<0.000000e+00> : vector<8x512xf32>
    %10 = tpu.matmul %9, %8, %cst {dimension_numbers = #tpu.dot_dimension_numbers<[1], [0], [0], [1], [0, 0, 1, 1], [], []>} : vector<8x8xf32>, vector<8x512xf32>, vector<8x512xf32> -> vector<8x512xf32>
    %c0_10 = arith.constant 0 : index
    %c0_11 = arith.constant 0 : index
    %11 = vector.load %arg4[%c0_10, %c0_11] : memref<8x1xf32, #tpu.memory_space<vmem>>, vector<8x1xf32>
    %12 = vector.broadcast %11 : vector<8x1xf32> to vector<8x512xf32>
    %13 = arith.addf %10, %12 : vector<8x512xf32>
    %cst_12 = arith.constant 0.000000e+00 : f32
    %14 = vector.broadcast %cst_12 : f32 to vector<8x512xf32>
    %15 = arith.maximumf %13, %14 : vector<8x512xf32>
    %c1_i32 = arith.constant 1 : i32
    %16 = tpu.dynamic_rotate %15 by %c1_i32 dim 1 : vector<8x512xf32>, i32 -> vector<8x512xf32>
    %c0_13 = arith.constant 0 : index
    %c0_14 = arith.constant 0 : index
    %17 = vector.load %arg2[%c0_13, %c0_14] : memref<2x512xf32, #tpu.memory_space<vmem>>, vector<1x512xf32>
    %18 = vector.broadcast %17 : vector<1x512xf32> to vector<8x512xf32>
    %19 = arith.mulf %16, %18 : vector<8x512xf32>
    %c511_i32 = arith.constant 511 : i32
    %20 = tpu.dynamic_rotate %15 by %c511_i32 dim 1 : vector<8x512xf32>, i32 -> vector<8x512xf32>
    %c1_15 = arith.constant 1 : index
    %c0_16 = arith.constant 0 : index
    %21 = vector.load %arg2[%c1_15, %c0_16] : memref<2x512xf32, #tpu.memory_space<vmem>>, vector<1x512xf32>
    %22 = vector.broadcast %21 : vector<1x512xf32> to vector<8x512xf32>
    %23 = arith.mulf %20, %22 : vector<8x512xf32>
    %24 = tpu.concatenate %19, %15, %23 in 0 : vector<8x512xf32>, vector<8x512xf32>, vector<8x512xf32> -> vector<24x512xf32>
    %c0_17 = arith.constant 0 : index
    %c0_18 = arith.constant 0 : index
    %25 = vector.load %arg5[%c0_17, %c0_18] : memref<8x24xf32, #tpu.memory_space<vmem>>, vector<8x24xf32>
    %cst_19 = arith.constant dense<0.000000e+00> : vector<8x512xf32>
    %26 = tpu.matmul %25, %24, %cst_19 {dimension_numbers = #tpu.dot_dimension_numbers<[1], [0], [0], [1], [0, 0, 1, 1], [], []>} : vector<8x24xf32>, vector<24x512xf32>, vector<8x512xf32> -> vector<8x512xf32>
    %c0_20 = arith.constant 0 : index
    %c0_21 = arith.constant 0 : index
    %27 = vector.load %arg6[%c0_20, %c0_21] : memref<8x1xf32, #tpu.memory_space<vmem>>, vector<8x1xf32>
    %28 = vector.broadcast %27 : vector<8x1xf32> to vector<8x512xf32>
    %29 = arith.addf %26, %28 : vector<8x512xf32>
    %cst_22 = arith.constant 0.000000e+00 : f32
    %30 = vector.broadcast %cst_22 : f32 to vector<8x512xf32>
    %31 = arith.maximumf %29, %30 : vector<8x512xf32>
    %c0_23 = arith.constant 0 : index
    %c0_24 = arith.constant 0 : index
    %32 = vector.load %arg7[%c0_23, %c0_24] : memref<32x8xf32, #tpu.memory_space<vmem>>, vector<32x8xf32>
    %cst_25 = arith.constant dense<0.000000e+00> : vector<32x512xf32>
    %33 = tpu.matmul %32, %31, %cst_25 {dimension_numbers = #tpu.dot_dimension_numbers<[1], [0], [0], [1], [0, 0, 1, 1], [], []>} : vector<32x8xf32>, vector<8x512xf32>, vector<32x512xf32> -> vector<32x512xf32>
    %c0_26 = arith.constant 0 : index
    %c0_27 = arith.constant 0 : index
    %34 = vector.load %arg8[%c0_26, %c0_27] : memref<32x1xf32, #tpu.memory_space<vmem>>, vector<32x1xf32>
    %35 = vector.broadcast %34 : vector<32x1xf32> to vector<32x512xf32>
    %36 = arith.addf %33, %35 : vector<32x512xf32>
    %c0_28 = arith.constant 0 : index
    %c0_29 = arith.constant 0 : index
    %37 = vector.load %arg9[%c0_28, %c0_29] : memref<32x8xf32, #tpu.memory_space<vmem>>, vector<32x8xf32>
    %cst_30 = arith.constant dense<0.000000e+00> : vector<32x512xf32>
    %38 = tpu.matmul %37, %8, %cst_30 {dimension_numbers = #tpu.dot_dimension_numbers<[1], [0], [0], [1], [0, 0, 1, 1], [], []>} : vector<32x8xf32>, vector<8x512xf32>, vector<32x512xf32> -> vector<32x512xf32>
    %c0_31 = arith.constant 0 : index
    %c0_32 = arith.constant 0 : index
    %39 = vector.load %arg10[%c0_31, %c0_32] : memref<32x1xf32, #tpu.memory_space<vmem>>, vector<32x1xf32>
    %40 = vector.broadcast %39 : vector<32x1xf32> to vector<32x512xf32>
    %41 = arith.addf %38, %40 : vector<32x512xf32>
    %42 = arith.addf %36, %41 : vector<32x512xf32>
    %cst_33 = arith.constant 0.000000e+00 : f32
    %43 = vector.broadcast %cst_33 : f32 to vector<32x512xf32>
    %44 = arith.maximumf %42, %43 : vector<32x512xf32>
    %45 = vector.extract_strided_slice %44 {offsets = [0, 0], sizes = [32, 128], strides = [1, 1]} : vector<32x512xf32> to vector<32x128xf32>
    %c0_34 = arith.constant 0 : index
    %c0_35 = arith.constant 0 : index
    %c0_36 = arith.constant 0 : index
    %46 = vector.load %arg11[%c0_34, %c0_35, %c0_36] : memref<4x32x128xf32, #tpu.memory_space<vmem>>, vector<1x32x128xf32>
    %47 = vector.shape_cast %46 : vector<1x32x128xf32> to vector<32x128xf32>
    %48 = vector.shape_cast %45 : vector<32x128xf32> to vector<1x32x128xf32>
    tpu.vector_store %arg11[%c0_34, %c0_35, %c0_36], %48 {strides = array<i32>} : memref<4x32x128xf32, #tpu.memory_space<vmem>>, vector<1x32x128xf32>,
    %49 = vector.extract_strided_slice %44 {offsets = [0, 128], sizes = [32, 128], strides = [1, 1]} : vector<32x512xf32> to vector<32x128xf32>
    %c1_37 = arith.constant 1 : index
    %c0_38 = arith.constant 0 : index
    %c0_39 = arith.constant 0 : index
    %50 = vector.load %arg11[%c1_37, %c0_38, %c0_39] : memref<4x32x128xf32, #tpu.memory_space<vmem>>, vector<1x32x128xf32>
    %51 = vector.shape_cast %50 : vector<1x32x128xf32> to vector<32x128xf32>
    %52 = vector.shape_cast %49 : vector<32x128xf32> to vector<1x32x128xf32>
    tpu.vector_store %arg11[%c1_37, %c0_38, %c0_39], %52 {strides = array<i32>} : memref<4x32x128xf32, #tpu.memory_space<vmem>>, vector<1x32x128xf32>,
    %53 = vector.extract_strided_slice %44 {offsets = [0, 256], sizes = [32, 128], strides = [1, 1]} : vector<32x512xf32> to vector<32x128xf32>
    %c2_40 = arith.constant 2 : index
    %c0_41 = arith.constant 0 : index
    %c0_42 = arith.constant 0 : index
    %54 = vector.load %arg11[%c2_40, %c0_41, %c0_42] : memref<4x32x128xf32, #tpu.memory_space<vmem>>, vector<1x32x128xf32>
    %55 = vector.shape_cast %54 : vector<1x32x128xf32> to vector<32x128xf32>
    %56 = vector.shape_cast %53 : vector<32x128xf32> to vector<1x32x128xf32>
    tpu.vector_store %arg11[%c2_40, %c0_41, %c0_42], %56 {strides = array<i32>} : memref<4x32x128xf32, #tpu.memory_space<vmem>>, vector<1x32x128xf32>,
    %57 = vector.extract_strided_slice %44 {offsets = [0, 384], sizes = [32, 128], strides = [1, 1]} : vector<32x512xf32> to vector<32x128xf32>
    %c3_43 = arith.constant 3 : index
    %c0_44 = arith.constant 0 : index
    %c0_45 = arith.constant 0 : index
    %58 = vector.load %arg11[%c3_43, %c0_44, %c0_45] : memref<4x32x128xf32, #tpu.memory_space<vmem>>, vector<1x32x128xf32>
    %59 = vector.shape_cast %58 : vector<1x32x128xf32> to vector<32x128xf32>
    %60 = vector.shape_cast %57 : vector<32x128xf32> to vector<1x32x128xf32>
    tpu.vector_store %arg11[%c3_43, %c0_44, %c0_45], %60 {strides = array<i32>} : memref<4x32x128xf32, #tpu.memory_space<vmem>>, vector<1x32x128xf32>,
    return
  }
  func.func @transform_0(%arg0: i32) -> (i32, i32, i32) {
    %c0_i32 = arith.constant 0 : i32
    %c0_i32_0 = arith.constant 0 : i32
    %c0_i32_1 = arith.constant 0 : i32
    return %arg0, %c0_i32, %c0_i32_0 : i32, i32, i32
  }
  func.func @transform_1(%arg0: i32) -> (i32, i32) {
    %c0_i32 = arith.constant 0 : i32
    %c0_i32_0 = arith.constant 0 : i32
    %c0_i32_1 = arith.constant 0 : i32
    return %c0_i32, %c0_i32_0 : i32, i32
  }
  func.func @transform_2(%arg0: i32) -> (i32, i32) {
    %c0_i32 = arith.constant 0 : i32
    %c0_i32_0 = arith.constant 0 : i32
    %c0_i32_1 = arith.constant 0 : i32
    return %c0_i32, %c0_i32_0 : i32, i32
  }
  func.func @transform_3(%arg0: i32) -> (i32, i32) {
    %c0_i32 = arith.constant 0 : i32
    %c0_i32_0 = arith.constant 0 : i32
    %c0_i32_1 = arith.constant 0 : i32
    return %c0_i32, %c0_i32_0 : i32, i32
  }
  func.func @transform_4(%arg0: i32) -> (i32, i32) {
    %c0_i32 = arith.constant 0 : i32
    %c0_i32_0 = arith.constant 0 : i32
    %c0_i32_1 = arith.constant 0 : i32
    return %c0_i32, %c0_i32_0 : i32, i32
  }
  func.func @transform_5(%arg0: i32) -> (i32, i32) {
    %c0_i32 = arith.constant 0 : i32
    %c0_i32_0 = arith.constant 0 : i32
    %c0_i32_1 = arith.constant 0 : i32
    return %c0_i32, %c0_i32_0 : i32, i32
  }
  func.func @transform_6(%arg0: i32) -> (i32, i32) {
    %c0_i32 = arith.constant 0 : i32
    %c0_i32_0 = arith.constant 0 : i32
    %c0_i32_1 = arith.constant 0 : i32
    return %c0_i32, %c0_i32_0 : i32, i32
  }
  func.func @transform_7(%arg0: i32) -> (i32, i32) {
    %c0_i32 = arith.constant 0 : i32
    %c0_i32_0 = arith.constant 0 : i32
    %c0_i32_1 = arith.constant 0 : i32
    return %c0_i32, %c0_i32_0 : i32, i32
  }
  func.func @transform_8(%arg0: i32) -> (i32, i32) {
    %c0_i32 = arith.constant 0 : i32
    %c0_i32_0 = arith.constant 0 : i32
    %c0_i32_1 = arith.constant 0 : i32
    return %c0_i32, %c0_i32_0 : i32, i32
  }
  func.func @transform_9(%arg0: i32) -> (i32, i32) {
    %c0_i32 = arith.constant 0 : i32
    %c0_i32_0 = arith.constant 0 : i32
    %c0_i32_1 = arith.constant 0 : i32
    return %c0_i32, %c0_i32_0 : i32, i32
  }
  func.func @transform_10(%arg0: i32) -> (i32, i32, i32) {
    %c0_i32 = arith.constant 0 : i32
    %c0_i32_0 = arith.constant 0 : i32
    %c0_i32_1 = arith.constant 0 : i32
    return %arg0, %c0_i32, %c0_i32_0 : i32, i32, i32
  }
}

</mosaic_0001>

<llo_original>
// kernel: tpu_custom_call.1
$region0: #{tpu_custom_call.1}
  #allocation0 [shape = 'u32[]', space=smem, size = 0x4, offset = 0x4, fixed_abs, tag = 'smem constant byte address 0x4 - core index']
  #allocation1 [shape = 'u32[144,128]{1,0:T(1,128)}', space=vmem, size = 0x12000, scoped, tag = 'internal scratch']
  %s0 = inlined_call_operand.vmem [shape: f32[4,8,128], index: 0, kind: input, shape index: {}]
  %s1 = inlined_call_operand.vmem [shape: f32[2,512], index: 1, kind: input, shape index: {}]
  %s2 = inlined_call_operand.vmem [shape: f32[8,8], index: 2, kind: input, shape index: {}]
  %s3 = inlined_call_operand.vmem [shape: f32[8,1], index: 3, kind: input, shape index: {}]
  %s4 = inlined_call_operand.vmem [shape: f32[8,24], index: 4, kind: input, shape index: {}]
  %s5 = inlined_call_operand.vmem [shape: f32[8,1], index: 5, kind: input, shape index: {}]
  %s6 = inlined_call_operand.vmem [shape: f32[32,8], index: 6, kind: input, shape index: {}]
  %s7 = inlined_call_operand.vmem [shape: f32[32,1], index: 7, kind: input, shape index: {}]
  %s8 = inlined_call_operand.vmem [shape: f32[32,8], index: 8, kind: input, shape index: {}]
  %s9 = inlined_call_operand.vmem [shape: f32[32,1], index: 9, kind: input, shape index: {}]
  %s10 = inlined_call_operand.hbm [shape: f32[4,32,128], index: 10, kind: output, shape index: {}]
  %s11 = sld [smem:[#allocation0]]
  $region50: #{tpu_custom_call.1} parent=0
    _
  %s13 = ssub.s32 1, %s11
  %s14 = scalar_select 0, %s13, %s11
  $region1: #{tpu_custom_call.1} parent=0
    #allocation2 [shape = 'u8[65536]{0}', space=vmem, size = 0x10000, scoped, tag = 'output window, operand 0, single buffered']
    #allocation3 [shape = 's32[1]{0}', space=sflag, size = 0x4, scoped, tag = 'scoped memory for tpu_custom_call.1']
    %15 = vsyncpa [#allocation3], 0
    // Predicated region
    $region2: #{tpu_custom_call.1} parent=1 // pred_check
      _
    $region3: #{tpu_custom_call.1} parent=1 // pred_check_branch
      %17 = sbr.rel (0) target = $region5
    $region4: #{tpu_custom_call.1} parent=1 // pred_region
      _
    $region5: #{tpu_custom_call.1} parent=1 // pred_fallthru
      _
    // Predicated region
    $region6: #{tpu_custom_call.1} parent=1 // pred_check
      _
    $region7: #{tpu_custom_call.1} parent=1 // pred_check_branch
      %19 = sbr.rel (0) target = $region9
    $region8: #{tpu_custom_call.1} parent=1 // pred_region
      _
    $region9: #{tpu_custom_call.1} parent=1 // pred_fallthru
      _
    // Predicated region
    $region10: #{tpu_custom_call.1} parent=1 // pred_check
      _
    $region11: #{tpu_custom_call.1} parent=1 // pred_check_branch
      %21 = sbr.rel (0) target = $region13
    $region12: #{tpu_custom_call.1} parent=1 // pred_region
      _
    $region13: #{tpu_custom_call.1} parent=1 // pred_fallthru
      _
    // Predicated region
    $region14: #{tpu_custom_call.1} parent=1 // pred_check
      _
    $region15: #{tpu_custom_call.1} parent=1 // pred_check_branch
      %23 = sbr.rel (0) target = $region17
    $region16: #{tpu_custom_call.1} parent=1 // pred_region
      _
    $region17: #{tpu_custom_call.1} parent=1 // pred_fallthru
      _
    // Predicated region
    $region18: #{tpu_custom_call.1} parent=1 // pred_check
      _
    $region19: #{tpu_custom_call.1} parent=1 // pred_check_branch
      %25 = sbr.rel (0) target = $region21
    $region20: #{tpu_custom_call.1} parent=1 // pred_region
      _
    $region21: #{tpu_custom_call.1} parent=1 // pred_fallthru
      _
    // Predicated region
    $region22: #{tpu_custom_call.1} parent=1 // pred_check
      _
    $region23: #{tpu_custom_call.1} parent=1 // pred_check_branch
      %27 = sbr.rel (0) target = $region25
    $region24: #{tpu_custom_call.1} parent=1 // pred_region
      _
    $region25: #{tpu_custom_call.1} parent=1 // pred_fallthru
      _
    // Predicated region
    $region26: #{tpu_custom_call.1} parent=1 // pred_check
      _
    $region27: #{tpu_custom_call.1} parent=1 // pred_check_branch
      %29 = sbr.rel (0) target = $region29
    $region28: #{tpu_custom_call.1} parent=1 // pred_region
      _
    $region29: #{tpu_custom_call.1} parent=1 // pred_fallthru
      _
    // Predicated region
    $region30: #{tpu_custom_call.1} parent=1 // pred_check
      _
    $region31: #{tpu_custom_call.1} parent=1 // pred_check_branch
      %31 = sbr.rel (0) target = $region33
    $region32: #{tpu_custom_call.1} parent=1 // pred_region
      _
    $region33: #{tpu_custom_call.1} parent=1 // pred_fallthru
      _
    // Predicated region
    $region34: #{tpu_custom_call.1} parent=1 // pred_check
      _
    $region35: #{tpu_custom_call.1} parent=1 // pred_check_branch
      %33 = sbr.rel (0) target = $region37
    $region36: #{tpu_custom_call.1} parent=1 // pred_region
      _
    $region37: #{tpu_custom_call.1} parent=1 // pred_fallthru
      _
    // Predicated region
    $region38: #{tpu_custom_call.1} parent=1 // pred_check
      _
    $region39: #{tpu_custom_call.1} parent=1 // pred_check_branch
      %35 = sbr.rel (0) target = $region41
    $region40: #{tpu_custom_call.1} parent=1 // pred_region
      _
    $region41: #{tpu_custom_call.1} parent=1 // pred_fallthru
      _
    %v36 = vld [vmem:[%s0] sm:$0xff]
    %s37 = scalar_lea.vmem %s0, 8
    %v38 = vld [vmem:[%s37] sm:$0xff]
    %s39 = scalar_lea.vmem %s0, 16
    %v40 = vld [vmem:[%s39] sm:$0xff]
    %s41 = scalar_lea.vmem %s0, 24
    %v42 = vld [vmem:[%s41] sm:$0xff]
    %v43 = vld [vmem:[%s2] sm:$0xff]
    %v44 = vld [vmem:[%s3] sm:$0xff]
    %46 = vset.pattern.permute.xlu0 0
    %47 = vperm.xlu0 %46, %v44
    %v48 = vpop.permute.xlu0 %47
    %vm50 = vcmask 64512
    %v52 = vsel %vm50, %v43, 0
    %54 = vmatprep.subr.mxu0 0.0
    %55 = vmatpush1.msra.mxu0 0.0
    %56 = vmatprep.subr.mxu0 0.0
    %57 = vmatpush1.msra.mxu0 0.0
    %58 = vmatprep.subr.mxu0 0.0
    %59 = vmatpush1.msra.mxu0 0.0
    %60 = vmatprep.subr.mxu0 0.0
    %61 = vmatpush1.msra.mxu0 0.0
    %62 = vmatprep.subr.mxu0 0.0
    %63 = vmatpush1.msra.mxu0 0.0
    %64 = vmatprep.subr.mxu0 0.0
    %65 = vmatpush1.msra.mxu0 0.0
    %66 = vmatprep.subr.mxu0 0.0
    %67 = vmatpush1.msra.mxu0 0.0
    %68 = vmatprep.subr.mxu0 0.0
    %69 = vmatpush1.msra.mxu0 0.0
    %70 = vmatprep.subr.mxu0 0.0
    %71 = vmatpush1.msra.mxu0 0.0
    %72 = vmatprep.subr.mxu0 0.0
    %73 = vmatpush1.msra.mxu0 0.0
    %74 = vmatprep.subr.mxu0 0.0
    %75 = vmatpush1.msra.mxu0 0.0
    %76 = vmatprep.subr.mxu0 0.0
    %77 = vmatpush1.msra.mxu0 0.0
    %78 = vmatprep.subr.mxu0 0.0
    %79 = vmatpush1.msra.mxu0 0.0
    %80 = vmatprep.subr.mxu0 0.0
    %81 = vmatpush1.msra.mxu0 0.0
    %82 = vmatprep.subr.mxu0 0.0
    %83 = vmatpush1.msra.mxu0 0.0
    %84 = vmatprep.subr.mxu0 %v38
    %85 = vmatpush1.msra.mxu0 %v36
    %86 = vmatprep.subr.mxu0 0.0
    %87 = vmatpush2.msra.mxu0 0.0
    %88 = vmatprep.subr.mxu0 0.0
    %89 = vmatpush2.msra.mxu0 0.0
    %90 = vmatprep.subr.mxu0 0.0
    %91 = vmatpush2.msra.mxu0 0.0
    %92 = vmatprep.subr.mxu0 0.0
    %93 = vmatpush2.msra.mxu0 0.0
    %94 = vmatprep.subr.mxu0 0.0
    %95 = vmatpush2.msra.mxu0 0.0
    %96 = vmatprep.subr.mxu0 0.0
    %97 = vmatpush2.msra.mxu0 0.0
    %98 = vmatprep.subr.mxu0 0.0
    %99 = vmatpush2.msra.mxu0 0.0
    %100 = vmatprep.subr.mxu0 0.0
    %101 = vmatpush2.msra.mxu0 0.0
    %102 = vmatprep.subr.mxu0 0.0
    %103 = vmatpush2.msra.mxu0 0.0
    %104 = vmatprep.subr.mxu0 0.0
    %105 = vmatpush2.msra.mxu0 0.0
    %106 = vmatprep.subr.mxu0 0.0
    %107 = vmatpush2.msra.mxu0 0.0
    %108 = vmatprep.subr.mxu0 0.0
    %109 = vmatpush2.msra.mxu0 0.0
    %110 = vmatprep.subr.mxu0 0.0
    %111 = vmatpush2.msra.mxu0 0.0
    %112 = vmatprep.subr.mxu0 0.0
    %113 = vmatpush2.msra.mxu0 0.0
    %114 = vmatprep.subr.mxu0 0.0
    %115 = vmatpush2.msra.mxu0 0.0
    %116 = vmatprep.subr.mxu0 0.0
    %117 = vmatpush2.msra.mxu0 0.0
    %118 = vmatprep.mubr.f32.mxu0 0.0
    %119 = vmatmul.mubr.f32.gmra.mxu0 %v52
    %v120 = vpop.f32.mrf.mxu0
    %v121 = vadd.f32 %v48, %v120
    %v122 = vpop.f32.mrf.mxu0
    %v123 = vadd.f32 %v48, %v122
    %124 = vdwg.mxu0
    %125 = vmatprep.subr.mxu0 0.0
    %126 = vmatpush1.msra.mxu0 0.0
    %127 = vmatprep.subr.mxu0 0.0
    %128 = vmatpush1.msra.mxu0 0.0
    %129 = vmatprep.subr.mxu0 0.0
    %130 = vmatpush1.msra.mxu0 0.0
    %131 = vmatprep.subr.mxu0 0.0
    %132 = vmatpush1.msra.mxu0 0.0
    %133 = vmatprep.subr.mxu0 0.0
    %134 = vmatpush1.msra.mxu0 0.0
    %135 = vmatprep.subr.mxu0 0.0
    %136 = vmatpush1.msra.mxu0 0.0
    %137 = vmatprep.subr.mxu0 0.0
    %138 = vmatpush1.msra.mxu0 0.0
    %139 = vmatprep.subr.mxu0 0.0
    %140 = vmatpush1.msra.mxu0 0.0
    %141 = vmatprep.subr.mxu0 0.0
    %142 = vmatpush1.msra.mxu0 0.0
    %143 = vmatprep.subr.mxu0 0.0
    %144 = vmatpush1.msra.mxu0 0.0
    %145 = vmatprep.subr.mxu0 0.0
    %146 = vmatpush1.msra.mxu0 0.0
    %147 = vmatprep.subr.mxu0 0.0
    %148 = vmatpush1.msra.mxu0 0.0
    %149 = vmatprep.subr.mxu0 0.0
    %150 = vmatpush1.msra.mxu0 0.0
    %151 = vmatprep.subr.mxu0 0.0
    %152 = vmatpush1.msra.mxu0 0.0
    %153 = vmatprep.subr.mxu0 0.0
    %154 = vmatpush1.msra.mxu0 0.0
    %155 = vmatprep.subr.mxu0 %v42
    %156 = vmatpush1.msra.mxu0 %v40
    %157 = vmatprep.subr.mxu0 0.0
    %158 = vmatpush2.msra.mxu0 0.0
    %159 = vmatprep.subr.mxu0 0.0
    %160 = vmatpush2.msra.mxu0 0.0
    %161 = vmatprep.subr.mxu0 0.0
    %162 = vmatpush2.msra.mxu0 0.0
    %163 = vmatprep.subr.mxu0 0.0
    %164 = vmatpush2.msra.mxu0 0.0
    %165 = vmatprep.subr.mxu0 0.0
    %166 = vmatpush2.msra.mxu0 0.0
    %167 = vmatprep.subr.mxu0 0.0
    %168 = vmatpush2.msra.mxu0 0.0
    %169 = vmatprep.subr.mxu0 0.0
    %170 = vmatpush2.msra.mxu0 0.0
    %171 = vmatprep.subr.mxu0 0.0
    %172 = vmatpush2.msra.mxu0 0.0
    %173 = vmatprep.subr.mxu0 0.0
    %174 = vmatpush2.msra.mxu0 0.0
    %175 = vmatprep.subr.mxu0 0.0
    %176 = vmatpush2.msra.mxu0 0.0
    %177 = vmatprep.subr.mxu0 0.0
    %178 = vmatpush2.msra.mxu0 0.0
    %179 = vmatprep.subr.mxu0 0.0
    %180 = vmatpush2.msra.mxu0 0.0
    %181 = vmatprep.subr.mxu0 0.0
    %182 = vmatpush2.msra.mxu0 0.0
    %183 = vmatprep.subr.mxu0 0.0
    %184 = vmatpush2.msra.mxu0 0.0
    %185 = vmatprep.subr.mxu0 0.0
    %186 = vmatpush2.msra.mxu0 0.0
    %187 = vmatprep.subr.mxu0 0.0
    %188 = vmatpush2.msra.mxu0 0.0
    %189 = vmatprep.mubr.f32.mxu0 0.0
    %190 = vmatmul.mubr.f32.gmra.mxu0 %v52
    %v191 = vpop.f32.mrf.mxu0
    %v192 = vadd.f32 %v48, %v191
    %v193 = vpop.f32.mrf.mxu0
    %v194 = vadd.f32 %v48, %v193
    %195 = vdwg.mxu0
    %v196 = vmax.f32 %v121, 0.0
    %v197 = vmax.f32 %v123, 0.0
    %v198 = vmax.f32 %v192, 0.0
    %v199 = vmax.f32 %v194, 0.0
    %200 = vrot.lane.b32.xlu0 %v196, 1
    %v201 = vpop.permute.xlu0 %200
    %202 = vrot.lane.b32.xlu0 %v197, 1
    %v203 = vpop.permute.xlu0 %202
    %204 = vrot.lane.b32.xlu0 %v198, 1
    %v205 = vpop.permute.xlu0 %204
    %206 = vrot.lane.b32.xlu0 %v199, 1
    %v207 = vpop.permute.xlu0 %206
    %v208 = vlaneseq
    %v209 = vand.u32 %v208, 127
    %vm210 = vcmp.lt.s32.totalorder %v209, 1
    %v211 = vsel %vm210, %v205, %v207
    %v212 = vsel %vm210, %v203, %v205
    %v213 = vsel %vm210, %v201, %v203
    %v214 = vsel %vm210, %v207, %v201
    %v215 = vld [vmem:[%s1] ss:$2 sm:$0xf]
    %v217 = vlaneseq
    %v218 = vshrl.u32 %v217, 7
    %v219 = vsub.s32 0, %v218
    %v220 = vrot.slane %v215, %v219
    %v221 = vlaneseq
    %v222 = vshrl.u32 %v221, 7
    %v223 = vsub.s32 1, %v222
    %v224 = vrot.slane %v215, %v223
    %v225 = vlaneseq
    %v226 = vshrl.u32 %v225, 7
    %v227 = vsub.s32 2, %v226
    %v228 = vrot.slane %v215, %v227
    %v229 = vlaneseq
    %v230 = vshrl.u32 %v229, 7
    %v231 = vsub.s32 3, %v230
    %v232 = vrot.slane %v215, %v231
    %v237 = vmul.f32 %v214, %v220
    %v238 = vmul.f32 %v213, %v224
    %v239 = vmul.f32 %v212, %v228
    %v240 = vmul.f32 %v211, %v232
    %241 = vrot.lane.b32.xlu0 %v196, 127
    %v242 = vpop.permute.xlu0 %241
    %243 = vrot.lane.b32.xlu0 %v197, 127
    %v244 = vpop.permute.xlu0 %243
    %245 = vrot.lane.b32.xlu0 %v198, 127
    %v246 = vpop.permute.xlu0 %245
    %247 = vrot.lane.b32.xlu0 %v199, 127
    %v248 = vpop.permute.xlu0 %247
    %vm249 = vcmp.lt.s32.totalorder %v209, 127
    %v250 = vsel %vm249, %v246, %v248
    %v251 = vsel %vm249, %v244, %v246
    %v252 = vsel %vm249, %v242, %v244
    %v253 = vsel %vm249, %v248, %v242
    %s254 = scalar_lea.vmem %s1, 1
    %v255 = vld [vmem:[%s254] ss:$2 sm:$0xf]
    %v257 = vlaneseq
    %v258 = vshrl.u32 %v257, 7
    %v259 = vsub.s32 0, %v258
    %v260 = vrot.slane %v255, %v259
    %v261 = vlaneseq
    %v262 = vshrl.u32 %v261, 7
    %v263 = vsub.s32 1, %v262
    %v264 = vrot.slane %v255, %v263
    %v265 = vlaneseq
    %v266 = vshrl.u32 %v265, 7
    %v267 = vsub.s32 2, %v266
    %v268 = vrot.slane %v255, %v267
    %v269 = vlaneseq
    %v270 = vshrl.u32 %v269, 7
    %v271 = vsub.s32 3, %v270
    %v272 = vrot.slane %v255, %v271
    %v277 = vmul.f32 %v252, %v260
    %v278 = vmul.f32 %v251, %v264
    %v279 = vmul.f32 %v250, %v268
    %v280 = vmul.f32 %v253, %v272
    %v281 = vld [vmem:[%s4] sm:$0xff]
    %v282 = vld [vmem:[%s5] sm:$0xff]
    %284 = vset.pattern.permute.xlu0 0
    %285 = vperm.xlu0 %284, %v282
    %v286 = vpop.permute.xlu0 %285
    %vm288 = vcmask 195584
    %v290 = vsel %vm288, %v281, 0
    %292 = vmatprep.subr.mxu0 0.0
    %293 = vmatpush1.msra.mxu0 0.0
    %294 = vmatprep.subr.mxu0 0.0
    %295 = vmatpush1.msra.mxu0 0.0
    %296 = vmatprep.subr.mxu0 0.0
    %297 = vmatpush1.msra.mxu0 0.0
    %298 = vmatprep.subr.mxu0 0.0
    %299 = vmatpush1.msra.mxu0 0.0
    %300 = vmatprep.subr.mxu0 0.0
    %301 = vmatpush1.msra.mxu0 0.0
    %302 = vmatprep.subr.mxu0 0.0
    %303 = vmatpush1.msra.mxu0 0.0
    %304 = vmatprep.subr.mxu0 0.0
    %305 = vmatpush1.msra.mxu0 0.0
    %306 = vmatprep.subr.mxu0 0.0
    %307 = vmatpush1.msra.mxu0 0.0
    %308 = vmatprep.subr.mxu0 0.0
    %309 = vmatpush1.msra.mxu0 0.0
    %310 = vmatprep.subr.mxu0 0.0
    %311 = vmatpush1.msra.mxu0 0.0
    %312 = vmatprep.subr.mxu0 0.0
    %313 = vmatpush1.msra.mxu0 0.0
    %314 = vmatprep.subr.mxu0 0.0
    %315 = vmatpush1.msra.mxu0 0.0
    %316 = vmatprep.subr.mxu0 0.0
    %317 = vmatpush1.msra.mxu0 0.0
    %318 = vmatprep.subr.mxu0 %v278
    %319 = vmatpush1.msra.mxu0 %v277
    %320 = vmatprep.subr.mxu0 %v197
    %321 = vmatpush1.msra.mxu0 %v196
    %322 = vmatprep.subr.mxu0 %v238
    %323 = vmatpush1.msra.mxu0 %v237
    %324 = vmatprep.subr.mxu0 0.0
    %325 = vmatpush2.msra.mxu0 0.0
    %326 = vmatprep.subr.mxu0 0.0
    %327 = vmatpush2.msra.mxu0 0.0
    %328 = vmatprep.subr.mxu0 0.0
    %329 = vmatpush2.msra.mxu0 0.0
    %330 = vmatprep.subr.mxu0 0.0
    %331 = vmatpush2.msra.mxu0 0.0
    %332 = vmatprep.subr.mxu0 0.0
    %333 = vmatpush2.msra.mxu0 0.0
    %334 = vmatprep.subr.mxu0 0.0
    %335 = vmatpush2.msra.mxu0 0.0
    %336 = vmatprep.subr.mxu0 0.0
    %337 = vmatpush2.msra.mxu0 0.0
    %338 = vmatprep.subr.mxu0 0.0
    %339 = vmatpush2.msra.mxu0 0.0
    %340 = vmatprep.subr.mxu0 0.0
    %341 = vmatpush2.msra.mxu0 0.0
    %342 = vmatprep.subr.mxu0 0.0
    %343 = vmatpush2.msra.mxu0 0.0
    %344 = vmatprep.subr.mxu0 0.0
    %345 = vmatpush2.msra.mxu0 0.0
    %346 = vmatprep.subr.mxu0 0.0
    %347 = vmatpush2.msra.mxu0 0.0
    %348 = vmatprep.subr.mxu0 0.0
    %349 = vmatpush2.msra.mxu0 0.0
    %350 = vmatprep.subr.mxu0 0.0
    %351 = vmatpush2.msra.mxu0 0.0
    %352 = vmatprep.subr.mxu0 0.0
    %353 = vmatpush2.msra.mxu0 0.0
    %354 = vmatprep.subr.mxu0 0.0
    %355 = vmatpush2.msra.mxu0 0.0
    %356 = vmatprep.mubr.f32.mxu0 0.0
    %357 = vmatmul.mubr.f32.gmra.mxu0 %v290
    %v358 = vpop.f32.mrf.mxu0
    %v359 = vadd.f32 %v286, %v358
    %v360 = vpop.f32.mrf.mxu0
    %v361 = vadd.f32 %v286, %v360
    %362 = vdwg.mxu0
    %363 = vmatprep.subr.mxu0 0.0
    %364 = vmatpush1.msra.mxu0 0.0
    %365 = vmatprep.subr.mxu0 0.0
    %366 = vmatpush1.msra.mxu0 0.0
    %367 = vmatprep.subr.mxu0 0.0
    %368 = vmatpush1.msra.mxu0 0.0
    %369 = vmatprep.subr.mxu0 0.0
    %370 = vmatpush1.msra.mxu0 0.0
    %371 = vmatprep.subr.mxu0 0.0
    %372 = vmatpush1.msra.mxu0 0.0
    %373 = vmatprep.subr.mxu0 0.0
    %374 = vmatpush1.msra.mxu0 0.0
    %375 = vmatprep.subr.mxu0 0.0
    %376 = vmatpush1.msra.mxu0 0.0
    %377 = vmatprep.subr.mxu0 0.0
    %378 = vmatpush1.msra.mxu0 0.0
    %379 = vmatprep.subr.mxu0 0.0
    %380 = vmatpush1.msra.mxu0 0.0
    %381 = vmatprep.subr.mxu0 0.0
    %382 = vmatpush1.msra.mxu0 0.0
    %383 = vmatprep.subr.mxu0 0.0
    %384 = vmatpush1.msra.mxu0 0.0
    %385 = vmatprep.subr.mxu0 0.0
    %386 = vmatpush1.msra.mxu0 0.0
    %387 = vmatprep.subr.mxu0 0.0
    %388 = vmatpush1.msra.mxu0 0.0
    %389 = vmatprep.subr.mxu0 %v280
    %390 = vmatpush1.msra.mxu0 %v279
    %391 = vmatprep.subr.mxu0 %v199
    %392 = vmatpush1.msra.mxu0 %v198
    %393 = vmatprep.subr.mxu0 %v240
    %394 = vmatpush1.msra.mxu0 %v239
    %395 = vmatprep.subr.mxu0 0.0
    %396 = vmatpush2.msra.mxu0 0.0
    %397 = vmatprep.subr.mxu0 0.0
    %398 = vmatpush2.msra.mxu0 0.0
    %399 = vmatprep.subr.mxu0 0.0
    %400 = vmatpush2.msra.mxu0 0.0
    %401 = vmatprep.subr.mxu0 0.0
    %402 = vmatpush2.msra.mxu0 0.0
    %403 = vmatprep.subr.mxu0 0.0
    %404 = vmatpush2.msra.mxu0 0.0
    %405 = vmatprep.subr.mxu0 0.0
    %406 = vmatpush2.msra.mxu0 0.0
    %407 = vmatprep.subr.mxu0 0.0
    %408 = vmatpush2.msra.mxu0 0.0
    %409 = vmatprep.subr.mxu0 0.0
    %410 = vmatpush2.msra.mxu0 0.0
    %411 = vmatprep.subr.mxu0 0.0
    %412 = vmatpush2.msra.mxu0 0.0
    %413 = vmatprep.subr.mxu0 0.0
    %414 = vmatpush2.msra.mxu0 0.0
    %415 = vmatprep.subr.mxu0 0.0
    %416 = vmatpush2.msra.mxu0 0.0
    %417 = vmatprep.subr.mxu0 0.0
    %418 = vmatpush2.msra.mxu0 0.0
    %419 = vmatprep.subr.mxu0 0.0
    %420 = vmatpush2.msra.mxu0 0.0
    %421 = vmatprep.subr.mxu0 0.0
    %422 = vmatpush2.msra.mxu0 0.0
    %423 = vmatprep.subr.mxu0 0.0
    %424 = vmatpush2.msra.mxu0 0.0
    %425 = vmatprep.subr.mxu0 0.0
    %426 = vmatpush2.msra.mxu0 0.0
    %427 = vmatprep.mubr.f32.mxu0 0.0
    %428 = vmatmul.mubr.f32.gmra.mxu0 %v290
    %v429 = vpop.f32.mrf.mxu0
    %v430 = vadd.f32 %v286, %v429
    %v431 = vpop.f32.mrf.mxu0
    %v432 = vadd.f32 %v286, %v431
    %433 = vdwg.mxu0
    %v434 = vmax.f32 %v359, 0.0
    %v435 = vmax.f32 %v361, 0.0
    %v436 = vmax.f32 %v430, 0.0
    %v437 = vmax.f32 %v432, 0.0
    %v438 = vld [vmem:[%s6] sm:$0xff]
    %v439 = vld [vmem:[%s6 + $0x8] sm:$0xff]
    %v440 = vld [vmem:[%s6 + $0x10] sm:$0xff]
    %v441 = vld [vmem:[%s6 + $0x18] sm:$0xff]
    %v442 = vld [vmem:[%s7] sm:$0xff]
    %v443 = vld [vmem:[%s7 + $0x8] sm:$0xff]
    %v444 = vld [vmem:[%s7 + $0x10] sm:$0xff]
    %v445 = vld [vmem:[%s7 + $0x18] sm:$0xff]
    %447 = vset.pattern.permute.xlu0 0
    %448 = vperm.xlu0 %447, %v442
    %v449 = vpop.permute.xlu0 %448
    %452 = vset.pattern.permute.xlu0 0
    %453 = vperm.xlu0 %452, %v443
    %v454 = vpop.permute.xlu0 %453
    %457 = vset.pattern.permute.xlu0 0
    %458 = vperm.xlu0 %457, %v444
    %v459 = vpop.permute.xlu0 %458
    %462 = vset.pattern.permute.xlu0 0
    %463 = vperm.xlu0 %462, %v445
    %v464 = vpop.permute.xlu0 %463
    %v467 = vsel %vm50, %v438, 0
    %v470 = vsel %vm50, %v439, 0
    %v473 = vsel %vm50, %v440, 0
    %v476 = vsel %vm50, %v441, 0
    %478 = vmatprep.subr.mxu0 0.0
    %479 = vmatpush1.msra.mxu0 0.0
    %480 = vmatprep.subr.mxu0 0.0
    %481 = vmatpush1.msra.mxu0 0.0
    %482 = vmatprep.subr.mxu0 0.0
    %483 = vmatpush1.msra.mxu0 0.0
    %484 = vmatprep.subr.mxu0 0.0
    %485 = vmatpush1.msra.mxu0 0.0
    %486 = vmatprep.subr.mxu0 0.0
    %487 = vmatpush1.msra.mxu0 0.0
    %488 = vmatprep.subr.mxu0 0.0
    %489 = vmatpush1.msra.mxu0 0.0
    %490 = vmatprep.subr.mxu0 0.0
    %491 = vmatpush1.msra.mxu0 0.0
    %492 = vmatprep.subr.mxu0 0.0
    %493 = vmatpush1.msra.mxu0 0.0
    %494 = vmatprep.subr.mxu0 0.0
    %495 = vmatpush1.msra.mxu0 0.0
    %496 = vmatprep.subr.mxu0 0.0
    %497 = vmatpush1.msra.mxu0 0.0
    %498 = vmatprep.subr.mxu0 0.0
    %499 = vmatpush1.msra.mxu0 0.0
    %500 = vmatprep.subr.mxu0 0.0
    %501 = vmatpush1.msra.mxu0 0.0
    %502 = vmatprep.subr.mxu0 0.0
    %503 = vmatpush1.msra.mxu0 0.0
    %504 = vmatprep.subr.mxu0 0.0
    %505 = vmatpush1.msra.mxu0 0.0
    %506 = vmatprep.subr.mxu0 0.0
    %507 = vmatpush1.msra.mxu0 0.0
    %508 = vmatprep.subr.mxu0 %v435
    %509 = vmatpush1.msra.mxu0 %v434
    %510 = vmatprep.subr.mxu0 0.0
    %511 = vmatpush2.msra.mxu0 0.0
    %512 = vmatprep.subr.mxu0 0.0
    %513 = vmatpush2.msra.mxu0 0.0
    %514 = vmatprep.subr.mxu0 0.0
    %515 = vmatpush2.msra.mxu0 0.0
    %516 = vmatprep.subr.mxu0 0.0
    %517 = vmatpush2.msra.mxu0 0.0
    %518 = vmatprep.subr.mxu0 0.0
    %519 = vmatpush2.msra.mxu0 0.0
    %520 = vmatprep.subr.mxu0 0.0
    %521 = vmatpush2.msra.mxu0 0.0
    %522 = vmatprep.subr.mxu0 0.0
    %523 = vmatpush2.msra.mxu0 0.0
    %524 = vmatprep.subr.mxu0 0.0
    %525 = vmatpush2.msra.mxu0 0.0
    %526 = vmatprep.subr.mxu0 0.0
    %527 = vmatpush2.msra.mxu0 0.0
    %528 = vmatprep.subr.mxu0 0.0
    %529 = vmatpush2.msra.mxu0 0.0
    %530 = vmatprep.subr.mxu0 0.0
    %531 = vmatpush2.msra.mxu0 0.0
    %532 = vmatprep.subr.mxu0 0.0
    %533 = vmatpush2.msra.mxu0 0.0
    %534 = vmatprep.subr.mxu0 0.0
    %535 = vmatpush2.msra.mxu0 0.0
    %536 = vmatprep.subr.mxu0 0.0
    %537 = vmatpush2.msra.mxu0 0.0
    %538 = vmatprep.subr.mxu0 0.0
    %539 = vmatpush2.msra.mxu0 0.0
    %540 = vmatprep.subr.mxu0 0.0
    %541 = vmatpush2.msra.mxu0 0.0
    %542 = vmatprep.mubr.f32.mxu0 0.0
    %543 = vmatmul.mubr.f32.gmra.mxu0 %v467
    %v544 = vpop.f32.mrf.mxu0
    %v545 = vadd.f32 %v449, %v544
    %v546 = vpop.f32.mrf.mxu0
    %v547 = vadd.f32 %v449, %v546
    %548 = vmatprep.mubr.f32.mxu0 0.0
    %549 = vmatmul.mubr.f32.gmra.mxu0 %v470
    %v550 = vpop.f32.mrf.mxu0
    %v551 = vadd.f32 %v454, %v550
    %v552 = vpop.f32.mrf.mxu0
    %v553 = vadd.f32 %v454, %v552
    %554 = vmatprep.mubr.f32.mxu0 0.0
    %555 = vmatmul.mubr.f32.gmra.mxu0 %v473
    %v556 = vpop.f32.mrf.mxu0
    %v557 = vadd.f32 %v459, %v556
    %v558 = vpop.f32.mrf.mxu0
    %v559 = vadd.f32 %v459, %v558
    %560 = vmatprep.mubr.f32.mxu0 0.0
    %561 = vmatmul.mubr.f32.gmra.mxu0 %v476
    %v562 = vpop.f32.mrf.mxu0
    %v563 = vadd.f32 %v464, %v562
    %v564 = vpop.f32.mrf.mxu0
    %v565 = vadd.f32 %v464, %v564
    %566 = vdwg.mxu0
    %567 = vmatprep.subr.mxu0 0.0
    %568 = vmatpush1.msra.mxu0 0.0
    %569 = vmatprep.subr.mxu0 0.0
    %570 = vmatpush1.msra.mxu0 0.0
    %571 = vmatprep.subr.mxu0 0.0
    %572 = vmatpush1.msra.mxu0 0.0
    %573 = vmatprep.subr.mxu0 0.0
    %574 = vmatpush1.msra.mxu0 0.0
    %575 = vmatprep.subr.mxu0 0.0
    %576 = vmatpush1.msra.mxu0 0.0
    %577 = vmatprep.subr.mxu0 0.0
    %578 = vmatpush1.msra.mxu0 0.0
    %579 = vmatprep.subr.mxu0 0.0
    %580 = vmatpush1.msra.mxu0 0.0
    %581 = vmatprep.subr.mxu0 0.0
    %582 = vmatpush1.msra.mxu0 0.0
    %583 = vmatprep.subr.mxu0 0.0
    %584 = vmatpush1.msra.mxu0 0.0
    %585 = vmatprep.subr.mxu0 0.0
    %586 = vmatpush1.msra.mxu0 0.0
    %587 = vmatprep.subr.mxu0 0.0
    %588 = vmatpush1.msra.mxu0 0.0
    %589 = vmatprep.subr.mxu0 0.0
    %590 = vmatpush1.msra.mxu0 0.0
    %591 = vmatprep.subr.mxu0 0.0
    %592 = vmatpush1.msra.mxu0 0.0
    %593 = vmatprep.subr.mxu0 0.0
    %594 = vmatpush1.msra.mxu0 0.0
    %595 = vmatprep.subr.mxu0 0.0
    %596 = vmatpush1.msra.mxu0 0.0
    %597 = vmatprep.subr.mxu0 %v437
    %598 = vmatpush1.msra.mxu0 %v436
    %599 = vmatprep.subr.mxu0 0.0
    %600 = vmatpush2.msra.mxu0 0.0
    %601 = vmatprep.subr.mxu0 0.0
    %602 = vmatpush2.msra.mxu0 0.0
    %603 = vmatprep.subr.mxu0 0.0
    %604 = vmatpush2.msra.mxu0 0.0
    %605 = vmatprep.subr.mxu0 0.0
    %606 = vmatpush2.msra.mxu0 0.0
    %607 = vmatprep.subr.mxu0 0.0
    %608 = vmatpush2.msra.mxu0 0.0
    %609 = vmatprep.subr.mxu0 0.0
    %610 = vmatpush2.msra.mxu0 0.0
    %611 = vmatprep.subr.mxu0 0.0
    %612 = vmatpush2.msra.mxu0 0.0
    %613 = vmatprep.subr.mxu0 0.0
    %614 = vmatpush2.msra.mxu0 0.0
    %615 = vmatprep.subr.mxu0 0.0
    %616 = vmatpush2.msra.mxu0 0.0
    %617 = vmatprep.subr.mxu0 0.0
    %618 = vmatpush2.msra.mxu0 0.0
    %619 = vmatprep.subr.mxu0 0.0
    %620 = vmatpush2.msra.mxu0 0.0
    %621 = vmatprep.subr.mxu0 0.0
    %622 = vmatpush2.msra.mxu0 0.0
    %623 = vmatprep.subr.mxu0 0.0
    %624 = vmatpush2.msra.mxu0 0.0
    %625 = vmatprep.subr.mxu0 0.0
    %626 = vmatpush2.msra.mxu0 0.0
    %627 = vmatprep.subr.mxu0 0.0
    %628 = vmatpush2.msra.mxu0 0.0
    %629 = vmatprep.subr.mxu0 0.0
    %630 = vmatpush2.msra.mxu0 0.0
    %631 = vmatprep.mubr.f32.mxu0 0.0
    %632 = vmatmul.mubr.f32.gmra.mxu0 %v467
    %v633 = vpop.f32.mrf.mxu0
    %v634 = vadd.f32 %v449, %v633
    %v635 = vpop.f32.mrf.mxu0
    %v636 = vadd.f32 %v449, %v635
    %637 = vmatprep.mubr.f32.mxu0 0.0
    %638 = vmatmul.mubr.f32.gmra.mxu0 %v470
    %v639 = vpop.f32.mrf.mxu0
    %v640 = vadd.f32 %v454, %v639
    %v641 = vpop.f32.mrf.mxu0
    %v642 = vadd.f32 %v454, %v641
    %643 = vmatprep.mubr.f32.mxu0 0.0
    %644 = vmatmul.mubr.f32.gmra.mxu0 %v473
    %v645 = vpop.f32.mrf.mxu0
    %v646 = vadd.f32 %v459, %v645
    %v647 = vpop.f32.mrf.mxu0
    %v648 = vadd.f32 %v459, %v647
    %649 = vmatprep.mubr.f32.mxu0 0.0
    %650 = vmatmul.mubr.f32.gmra.mxu0 %v476
    %v651 = vpop.f32.mrf.mxu0
    %v652 = vadd.f32 %v464, %v651
    %v653 = vpop.f32.mrf.mxu0
    %v654 = vadd.f32 %v464, %v653
    %655 = vdwg.mxu0
    %v656 = vld [vmem:[%s8] sm:$0xff]
    %v657 = vld [vmem:[%s8 + $0x8] sm:$0xff]
    %v658 = vld [vmem:[%s8 + $0x10] sm:$0xff]
    %v659 = vld [vmem:[%s8 + $0x18] sm:$0xff]
    %v660 = vld [vmem:[%s9] sm:$0xff]
    %v661 = vld [vmem:[%s9 + $0x8] sm:$0xff]
    %v662 = vld [vmem:[%s9 + $0x10] sm:$0xff]
    %v663 = vld [vmem:[%s9 + $0x18] sm:$0xff]
    %665 = vset.pattern.permute.xlu0 0
    %666 = vperm.xlu0 %665, %v660
    %v667 = vpop.permute.xlu0 %666
    %670 = vset.pattern.permute.xlu0 0
    %671 = vperm.xlu0 %670, %v661
    %v672 = vpop.permute.xlu0 %671
    %675 = vset.pattern.permute.xlu0 0
    %676 = vperm.xlu0 %675, %v662
    %v677 = vpop.permute.xlu0 %676
    %680 = vset.pattern.permute.xlu0 0
    %681 = vperm.xlu0 %680, %v663
    %v682 = vpop.permute.xlu0 %681
    %v685 = vsel %vm50, %v656, 0
    %v688 = vsel %vm50, %v657, 0
    %v691 = vsel %vm50, %v658, 0
    %v694 = vsel %vm50, %v659, 0
    %696 = vmatprep.subr.mxu0 0.0
    %697 = vmatpush1.msra.mxu0 0.0
    %698 = vmatprep.subr.mxu0 0.0
    %699 = vmatpush1.msra.mxu0 0.0
    %700 = vmatprep.subr.mxu0 0.0
    %701 = vmatpush1.msra.mxu0 0.0
    %702 = vmatprep.subr.mxu0 0.0
    %703 = vmatpush1.msra.mxu0 0.0
    %704 = vmatprep.subr.mxu0 0.0
    %705 = vmatpush1.msra.mxu0 0.0
    %706 = vmatprep.subr.mxu0 0.0
    %707 = vmatpush1.msra.mxu0 0.0
    %708 = vmatprep.subr.mxu0 0.0
    %709 = vmatpush1.msra.mxu0 0.0
    %710 = vmatprep.subr.mxu0 0.0
    %711 = vmatpush1.msra.mxu0 0.0
    %712 = vmatprep.subr.mxu0 0.0
    %713 = vmatpush1.msra.mxu0 0.0
    %714 = vmatprep.subr.mxu0 0.0
    %715 = vmatpush1.msra.mxu0 0.0
    %716 = vmatprep.subr.mxu0 0.0
    %717 = vmatpush1.msra.mxu0 0.0
    %718 = vmatprep.subr.mxu0 0.0
    %719 = vmatpush1.msra.mxu0 0.0
    %720 = vmatprep.subr.mxu0 0.0
    %721 = vmatpush1.msra.mxu0 0.0
    %722 = vmatprep.subr.mxu0 0.0
    %723 = vmatpush1.msra.mxu0 0.0
    %724 = vmatprep.subr.mxu0 0.0
    %725 = vmatpush1.msra.mxu0 0.0
    %726 = vmatprep.subr.mxu0 %v38
    %727 = vmatpush1.msra.mxu0 %v36
    %728 = vmatprep.subr.mxu0 0.0
    %729 = vmatpush2.msra.mxu0 0.0
    %730 = vmatprep.subr.mxu0 0.0
    %731 = vmatpush2.msra.mxu0 0.0
    %732 = vmatprep.subr.mxu0 0.0
    %733 = vmatpush2.msra.mxu0 0.0
    %734 = vmatprep.subr.mxu0 0.0
    %735 = vmatpush2.msra.mxu0 0.0
    %736 = vmatprep.subr.mxu0 0.0
    %737 = vmatpush2.msra.mxu0 0.0
    %738 = vmatprep.subr.mxu0 0.0
    %739 = vmatpush2.msra.mxu0 0.0
    %740 = vmatprep.subr.mxu0 0.0
    %741 = vmatpush2.msra.mxu0 0.0
    %742 = vmatprep.subr.mxu0 0.0
    %743 = vmatpush2.msra.mxu0 0.0
    %744 = vmatprep.subr.mxu0 0.0
    %745 = vmatpush2.msra.mxu0 0.0
    %746 = vmatprep.subr.mxu0 0.0
    %747 = vmatpush2.msra.mxu0 0.0
    %748 = vmatprep.subr.mxu0 0.0
    %749 = vmatpush2.msra.mxu0 0.0
    %750 = vmatprep.subr.mxu0 0.0
    %751 = vmatpush2.msra.mxu0 0.0
    %752 = vmatprep.subr.mxu0 0.0
    %753 = vmatpush2.msra.mxu0 0.0
    %754 = vmatprep.subr.mxu0 0.0
    %755 = vmatpush2.msra.mxu0 0.0
    %756 = vmatprep.subr.mxu0 0.0
    %757 = vmatpush2.msra.mxu0 0.0
    %758 = vmatprep.subr.mxu0 0.0
    %759 = vmatpush2.msra.mxu0 0.0
    %760 = vmatprep.mubr.f32.mxu0 0.0
    %761 = vmatmul.mubr.f32.gmra.mxu0 %v685
    %v762 = vpop.f32.mrf.mxu0
    %v763 = vadd.f32 %v667, %v762
    %v764 = vpop.f32.mrf.mxu0
    %v765 = vadd.f32 %v667, %v764
    %766 = vmatprep.mubr.f32.mxu0 0.0
    %767 = vmatmul.mubr.f32.gmra.mxu0 %v688
    %v768 = vpop.f32.mrf.mxu0
    %v769 = vadd.f32 %v672, %v768
    %v770 = vpop.f32.mrf.mxu0
    %v771 = vadd.f32 %v672, %v770
    %772 = vmatprep.mubr.f32.mxu0 0.0
    %773 = vmatmul.mubr.f32.gmra.mxu0 %v691
    %v774 = vpop.f32.mrf.mxu0
    %v775 = vadd.f32 %v677, %v774
    %v776 = vpop.f32.mrf.mxu0
    %v777 = vadd.f32 %v677, %v776
    %778 = vmatprep.mubr.f32.mxu0 0.0
    %779 = vmatmul.mubr.f32.gmra.mxu0 %v694
    %v780 = vpop.f32.mrf.mxu0
    %v781 = vadd.f32 %v682, %v780
    %v782 = vpop.f32.mrf.mxu0
    %v783 = vadd.f32 %v682, %v782
    %784 = vdwg.mxu0
    %785 = vmatprep.subr.mxu0 0.0
    %786 = vmatpush1.msra.mxu0 0.0
    %787 = vmatprep.subr.mxu0 0.0
    %788 = vmatpush1.msra.mxu0 0.0
    %789 = vmatprep.subr.mxu0 0.0
    %790 = vmatpush1.msra.mxu0 0.0
    %791 = vmatprep.subr.mxu0 0.0
    %792 = vmatpush1.msra.mxu0 0.0
    %793 = vmatprep.subr.mxu0 0.0
    %794 = vmatpush1.msra.mxu0 0.0
    %795 = vmatprep.subr.mxu0 0.0
    %796 = vmatpush1.msra.mxu0 0.0
    %797 = vmatprep.subr.mxu0 0.0
    %798 = vmatpush1.msra.mxu0 0.0
    %799 = vmatprep.subr.mxu0 0.0
    %800 = vmatpush1.msra.mxu0 0.0
    %801 = vmatprep.subr.mxu0 0.0
    %802 = vmatpush1.msra.mxu0 0.0
    %803 = vmatprep.subr.mxu0 0.0
    %804 = vmatpush1.msra.mxu0 0.0
    %805 = vmatprep.subr.mxu0 0.0
    %806 = vmatpush1.msra.mxu0 0.0
    %807 = vmatprep.subr.mxu0 0.0
    %808 = vmatpush1.msra.mxu0 0.0
    %809 = vmatprep.subr.mxu0 0.0
    %810 = vmatpush1.msra.mxu0 0.0
    %811 = vmatprep.subr.mxu0 0.0
    %812 = vmatpush1.msra.mxu0 0.0
    %813 = vmatprep.subr.mxu0 0.0
    %814 = vmatpush1.msra.mxu0 0.0
    %815 = vmatprep.subr.mxu0 %v42
    %816 = vmatpush1.msra.mxu0 %v40
    %817 = vmatprep.subr.mxu0 0.0
    %818 = vmatpush2.msra.mxu0 0.0
    %819 = vmatprep.subr.mxu0 0.0
    %820 = vmatpush2.msra.mxu0 0.0
    %821 = vmatprep.subr.mxu0 0.0
    %822 = vmatpush2.msra.mxu0 0.0
    %823 = vmatprep.subr.mxu0 0.0
    %824 = vmatpush2.msra.mxu0 0.0
    %825 = vmatprep.subr.mxu0 0.0
    %826 = vmatpush2.msra.mxu0 0.0
    %827 = vmatprep.subr.mxu0 0.0
    %828 = vmatpush2.msra.mxu0 0.0
    %829 = vmatprep.subr.mxu0 0.0
    %830 = vmatpush2.msra.mxu0 0.0
    %831 = vmatprep.subr.mxu0 0.0
    %832 = vmatpush2.msra.mxu0 0.0
    %833 = vmatprep.subr.mxu0 0.0
    %834 = vmatpush2.msra.mxu0 0.0
    %835 = vmatprep.subr.mxu0 0.0
    %836 = vmatpush2.msra.mxu0 0.0
    %837 = vmatprep.subr.mxu0 0.0
    %838 = vmatpush2.msra.mxu0 0.0
    %839 = vmatprep.subr.mxu0 0.0
    %840 = vmatpush2.msra.mxu0 0.0
    %841 = vmatprep.subr.mxu0 0.0
    %842 = vmatpush2.msra.mxu0 0.0
    %843 = vmatprep.subr.mxu0 0.0
    %844 = vmatpush2.msra.mxu0 0.0
    %845 = vmatprep.subr.mxu0 0.0
    %846 = vmatpush2.msra.mxu0 0.0
    %847 = vmatprep.subr.mxu0 0.0
    %848 = vmatpush2.msra.mxu0 0.0
    %849 = vmatprep.mubr.f32.mxu0 0.0
    %850 = vmatmul.mubr.f32.gmra.mxu0 %v685
    %v851 = vpop.f32.mrf.mxu0
    %v852 = vadd.f32 %v667, %v851
    %v853 = vpop.f32.mrf.mxu0
    %v854 = vadd.f32 %v667, %v853
    %855 = vmatprep.mubr.f32.mxu0 0.0
    %856 = vmatmul.mubr.f32.gmra.mxu0 %v688
    %v857 = vpop.f32.mrf.mxu0
    %v858 = vadd.f32 %v672, %v857
    %v859 = vpop.f32.mrf.mxu0
    %v860 = vadd.f32 %v672, %v859
    %861 = vmatprep.mubr.f32.mxu0 0.0
    %862 = vmatmul.mubr.f32.gmra.mxu0 %v691
    %v863 = vpop.f32.mrf.mxu0
    %v864 = vadd.f32 %v677, %v863
    %v865 = vpop.f32.mrf.mxu0
    %v866 = vadd.f32 %v677, %v865
    %867 = vmatprep.mubr.f32.mxu0 0.0
    %868 = vmatmul.mubr.f32.gmra.mxu0 %v694
    %v869 = vpop.f32.mrf.mxu0
    %v870 = vadd.f32 %v682, %v869
    %v871 = vpop.f32.mrf.mxu0
    %v872 = vadd.f32 %v682, %v871
    %873 = vdwg.mxu0
    %v874 = vadd.f32 %v545, %v763
    %v875 = vadd.f32 %v547, %v765
    %v876 = vadd.f32 %v634, %v852
    %v877 = vadd.f32 %v636, %v854
    %v878 = vadd.f32 %v551, %v769
    %v879 = vadd.f32 %v553, %v771
    %v880 = vadd.f32 %v640, %v858
    %v881 = vadd.f32 %v642, %v860
    %v882 = vadd.f32 %v557, %v775
    %v883 = vadd.f32 %v559, %v777
    %v884 = vadd.f32 %v646, %v864
    %v885 = vadd.f32 %v648, %v866
    %v886 = vadd.f32 %v563, %v781
    %v887 = vadd.f32 %v565, %v783
    %v888 = vadd.f32 %v652, %v870
    %v889 = vadd.f32 %v654, %v872
    %v890 = vmax.f32 %v874, 0.0
    %v891 = vmax.f32 %v875, 0.0
    %v892 = vmax.f32 %v876, 0.0
    %v893 = vmax.f32 %v877, 0.0
    %v894 = vmax.f32 %v878, 0.0
    %v895 = vmax.f32 %v879, 0.0
    %v896 = vmax.f32 %v880, 0.0
    %v897 = vmax.f32 %v881, 0.0
    %v898 = vmax.f32 %v882, 0.0
    %v899 = vmax.f32 %v883, 0.0
    %v900 = vmax.f32 %v884, 0.0
    %v901 = vmax.f32 %v885, 0.0
    %v902 = vmax.f32 %v886, 0.0
    %v903 = vmax.f32 %v887, 0.0
    %v904 = vmax.f32 %v888, 0.0
    %v905 = vmax.f32 %v889, 0.0
    %906 = vst [vmem:[#allocation2] sm:$0xff] %v890
    %907 = vst [vmem:[#allocation2 + $0x8] sm:$0xff] %v894
    %908 = vst [vmem:[#allocation2 + $0x10] sm:$0xff] %v898
    %909 = vst [vmem:[#allocation2 + $0x18] sm:$0xff] %v902
    %s910 = scalar_lea.vmem [#allocation2], 32
    %911 = vst [vmem:[%s910] sm:$0xff] %v891
    %912 = vst [vmem:[%s910 + $0x8] sm:$0xff] %v895
    %913 = vst [vmem:[%s910 + $0x10] sm:$0xff] %v899
    %914 = vst [vmem:[%s910 + $0x18] sm:$0xff] %v903
    %s915 = scalar_lea.vmem [#allocation2], 64
    %916 = vst [vmem:[%s915] sm:$0xff] %v892
    %917 = vst [vmem:[%s915 + $0x8] sm:$0xff] %v896
    %918 = vst [vmem:[%s915 + $0x10] sm:$0xff] %v900
    %919 = vst [vmem:[%s915 + $0x18] sm:$0xff] %v904
    %s920 = scalar_lea.vmem [#allocation2], 96
    %921 = vst [vmem:[%s920] sm:$0xff] %v893
    %922 = vst [vmem:[%s920 + $0x8] sm:$0xff] %v897
    %923 = vst [vmem:[%s920 + $0x10] sm:$0xff] %v901
    %924 = vst [vmem:[%s920 + $0x18] sm:$0xff] %v905
    // Predicated region
    $region42: #{tpu_custom_call.1} parent=1 // pred_check
      _
    $region43: #{tpu_custom_call.1} parent=1 // pred_check_branch
      %926 = sbr.rel (0) target = $region45
    $region44: #{tpu_custom_call.1} parent=1 // pred_region
      %s928 = ssub.s32 2048, 2048
      %929 = vsyncadd [#allocation3], %s928
      %s930 = sshll.u32 [#allocation2], 4
      %s931 = int_to_ptr.vmem [resolvable:$true] %s930
      %936 = dma.vmem_to_hbm [thread:$0]  %s931, 2048, %s10, [#allocation3], 128, 128, 8
    $region45: #{tpu_custom_call.1} parent=1 // pred_fallthru
      _
    // Predicated region
    $region46: #{tpu_custom_call.1} parent=1 // pred_check
      _
    $region47: #{tpu_custom_call.1} parent=1 // pred_check_branch
      %938 = sbr.rel (0) target = $region49
    $region48: #{tpu_custom_call.1} parent=1 // pred_region
      %939 = dma.done [#allocation3], 2048
    $region49: #{tpu_custom_call.1} parent=1 // pred_fallthru
      _
    %940 = vsyncpa [#allocation3], 1

// kernel: tpu_custom_call.1
$region0: #{tpu_custom_call.1}
  #allocation0 [shape = 'u32[]', space=smem, size = 0x4, offset = 0x4, fixed_abs, tag = 'smem constant byte address 0x4 - core index']
  #allocation1 [shape = 'u32[144,128]{1,0:T(1,128)}', space=vmem, size = 0x12000, scoped, tag = 'internal scratch']
  %s0 = inlined_call_operand.vmem [shape: f32[4,8,128], index: 0, kind: input, shape index: {}]
  %s1 = inlined_call_operand.vmem [shape: f32[2,512], index: 1, kind: input, shape index: {}]
  %s2 = inlined_call_operand.vmem [shape: f32[8,8], index: 2, kind: input, shape index: {}]
  %s3 = inlined_call_operand.vmem [shape: f32[8,1], index: 3, kind: input, shape index: {}]
  %s4 = inlined_call_operand.vmem [shape: f32[8,24], index: 4, kind: input, shape index: {}]
  %s5 = inlined_call_operand.vmem [shape: f32[8,1], index: 5, kind: input, shape index: {}]
  %s6 = inlined_call_operand.vmem [shape: f32[32,8], index: 6, kind: input, shape index: {}]
  %s7 = inlined_call_operand.vmem [shape: f32[32,1], index: 7, kind: input, shape index: {}]
  %s8 = inlined_call_operand.vmem [shape: f32[32,8], index: 8, kind: input, shape index: {}]
  %s9 = inlined_call_operand.vmem [shape: f32[32,1], index: 9, kind: input, shape index: {}]
  %s10 = inlined_call_operand.hbm [shape: f32[4,32,128], index: 10, kind: output, shape index: {}]
  %s11 = sld [smem:[#allocation0]]
  $region50: #{tpu_custom_call.1} parent=0
    _
  %s13 = ssub.s32 1, %s11
  %s14 = scalar_select 0, %s13, %s11
  $region1: #{tpu_custom_call.1} parent=0
    #allocation2 [shape = 'u8[65536]{0}', space=vmem, size = 0x10000, scoped, tag = 'output window, operand 0, single buffered']
    #allocation3 [shape = 's32[1]{0}', space=sflag, size = 0x4, scoped, tag = 'scoped memory for tpu_custom_call.1']
    %15 = vsyncpa [#allocation3], 0
    // Predicated region
    $region2: #{tpu_custom_call.1} parent=1 // pred_check
      _
    $region3: #{tpu_custom_call.1} parent=1 // pred_check_branch
      %17 = sbr.rel (0) target = $region5
    $region4: #{tpu_custom_call.1} parent=1 // pred_region
      _
    $region5: #{tpu_custom_call.1} parent=1 // pred_fallthru
      _
    // Predicated region
    $region6: #{tpu_custom_call.1} parent=1 // pred_check
      _
    $region7: #{tpu_custom_call.1} parent=1 // pred_check_branch
      %19 = sbr.rel (0) target = $region9
    $region8: #{tpu_custom_call.1} parent=1 // pred_region
      _
    $region9: #{tpu_custom_call.1} parent=1 // pred_fallthru
      _
    // Predicated region
    $region10: #{tpu_custom_call.1} parent=1 // pred_check
      _
    $region11: #{tpu_custom_call.1} parent=1 // pred_check_branch
      %21 = sbr.rel (0) target = $region13
    $region12: #{tpu_custom_call.1} parent=1 // pred_region
      _
    $region13: #{tpu_custom_call.1} parent=1 // pred_fallthru
      _
    // Predicated region
    $region14: #{tpu_custom_call.1} parent=1 // pred_check
      _
    $region15: #{tpu_custom_call.1} parent=1 // pred_check_branch
      %23 = sbr.rel (0) target = $region17
    $region16: #{tpu_custom_call.1} parent=1 // pred_region
      _
    $region17: #{tpu_custom_call.1} parent=1 // pred_fallthru
      _
    // Predicated region
    $region18: #{tpu_custom_call.1} parent=1 // pred_check
      _
    $region19: #{tpu_custom_call.1} parent=1 // pred_check_branch
      %25 = sbr.rel (0) target = $region21
    $region20: #{tpu_custom_call.1} parent=1 // pred_region
      _
    $region21: #{tpu_custom_call.1} parent=1 // pred_fallthru
      _
    // Predicated region
    $region22: #{tpu_custom_call.1} parent=1 // pred_check
      _
    $region23: #{tpu_custom_call.1} parent=1 // pred_check_branch
      %27 = sbr.rel (0) target = $region25
    $region24: #{tpu_custom_call.1} parent=1 // pred_region
      _
    $region25: #{tpu_custom_call.1} parent=1 // pred_fallthru
      _
    // Predicated region
    $region26: #{tpu_custom_call.1} parent=1 // pred_check
      _
    $region27: #{tpu_custom_call.1} parent=1 // pred_check_branch
      %29 = sbr.rel (0) target = $region29
    $region28: #{tpu_custom_call.1} parent=1 // pred_region
      _
    $region29: #{tpu_custom_call.1} parent=1 // pred_fallthru
      _
    // Predicated region
    $region30: #{tpu_custom_call.1} parent=1 // pred_check
      _
    $region31: #{tpu_custom_call.1} parent=1 // pred_check_branch
      %31 = sbr.rel (0) target = $region33
    $region32: #{tpu_custom_call.1} parent=1 // pred_region
      _
    $region33: #{tpu_custom_call.1} parent=1 // pred_fallthru
      _
    // Predicated region
    $region34: #{tpu_custom_call.1} parent=1 // pred_check
      _
    $region35: #{tpu_custom_call.1} parent=1 // pred_check_branch
      %33 = sbr.rel (0) target = $region37
    $region36: #{tpu_custom_call.1} parent=1 // pred_region
      _
    $region37: #{tpu_custom_call.1} parent=1 // pred_fallthru
      _
    // Predicated region
    $region38: #{tpu_custom_call.1} parent=1 // pred_check
      _
    $region39: #{tpu_custom_call.1} parent=1 // pred_check_branch
      %35 = sbr.rel (0) target = $region41
    $region40: #{tpu_custom_call.1} parent=1 // pred_region
      _
    $region41: #{tpu_custom_call.1} parent=1 // pred_fallthru
      _
    %v36 = vld [vmem:[%s0] sm:$0xff]
    %s37 = scalar_lea.vmem %s0, 8
    %v38 = vld [vmem:[%s37] sm:$0xff]
    %s39 = scalar_lea.vmem %s0, 16
    %v40 = vld [vmem:[%s39] sm:$0xff]
    %s41 = scalar_lea.vmem %s0, 24
    %v42 = vld [vmem:[%s41] sm:$0xff]
    %v43 = vld [vmem:[%s2] sm:$0xff]
    %v44 = vld [vmem:[%s3] sm:$0xff]
    %46 = vset.pattern.permute.xlu0 0
    %47 = vperm.xlu0 %46, %v44
    %v48 = vpop.permute.xlu0 %47
    %vm50 = vcmask 64512
    %v52 = vsel %vm50, %v43, 0
    %54 = vmatprep.subr.mxu0 0.0
    %55 = vmatpush1.msra.mxu0 0.0
    %56 = vmatprep.subr.mxu0 0.0
    %57 = vmatpush1.msra.mxu0 0.0
    %58 = vmatprep.subr.mxu0 0.0
    %59 = vmatpush1.msra.mxu0 0.0
    %60 = vmatprep.subr.mxu0 0.0
    %61 = vmatpush1.msra.mxu0 0.0
    %62 = vmatprep.subr.mxu0 0.0
    %63 = vmatpush1.msra.mxu0 0.0
    %64 = vmatprep.subr.mxu0 0.0
    %65 = vmatpush1.msra.mxu0 0.0
    %66 = vmatprep.subr.mxu0 0.0
    %67 = vmatpush1.msra.mxu0 0.0
    %68 = vmatprep.subr.mxu0 0.0
    %69 = vmatpush1.msra.mxu0 0.0
    %70 = vmatprep.subr.mxu0 0.0
    %71 = vmatpush1.msra.mxu0 0.0
    %72 = vmatprep.subr.mxu0 0.0
    %73 = vmatpush1.msra.mxu0 0.0
    %74 = vmatprep.subr.mxu0 0.0
    %75 = vmatpush1.msra.mxu0 0.0
    %76 = vmatprep.subr.mxu0 0.0
    %77 = vmatpush1.msra.mxu0 0.0
    %78 = vmatprep.subr.mxu0 0.0
    %79 = vmatpush1.msra.mxu0 0.0
    %80 = vmatprep.subr.mxu0 0.0
    %81 = vmatpush1.msra.mxu0 0.0
    %82 = vmatprep.subr.mxu0 0.0
    %83 = vmatpush1.msra.mxu0 0.0
    %84 = vmatprep.subr.mxu0 %v38
    %85 = vmatpush1.msra.mxu0 %v36
    %86 = vmatprep.subr.mxu0 0.0
    %87 = vmatpush2.msra.mxu0 0.0
    %88 = vmatprep.subr.mxu0 0.0
    %89 = vmatpush2.msra.mxu0 0.0
    %90 = vmatprep.subr.mxu0 0.0
    %91 = vmatpush2.msra.mxu0 0.0
    %92 = vmatprep.subr.mxu0 0.0
    %93 = vmatpush2.msra.mxu0 0.0
    %94 = vmatprep.subr.mxu0 0.0
    %95 = vmatpush2.msra.mxu0 0.0
    %96 = vmatprep.subr.mxu0 0.0
    %97 = vmatpush2.msra.mxu0 0.0
    %98 = vmatprep.subr.mxu0 0.0
    %99 = vmatpush2.msra.mxu0 0.0
    %100 = vmatprep.subr.mxu0 0.0
    %101 = vmatpush2.msra.mxu0 0.0
    %102 = vmatprep.subr.mxu0 0.0
    %103 = vmatpush2.msra.mxu0 0.0
    %104 = vmatprep.subr.mxu0 0.0
    %105 = vmatpush2.msra.mxu0 0.0
    %106 = vmatprep.subr.mxu0 0.0
    %107 = vmatpush2.msra.mxu0 0.0
    %108 = vmatprep.subr.mxu0 0.0
    %109 = vmatpush2.msra.mxu0 0.0
    %110 = vmatprep.subr.mxu0 0.0
    %111 = vmatpush2.msra.mxu0 0.0
    %112 = vmatprep.subr.mxu0 0.0
    %113 = vmatpush2.msra.mxu0 0.0
    %114 = vmatprep.subr.mxu0 0.0
    %115 = vmatpush2.msra.mxu0 0.0
    %116 = vmatprep.subr.mxu0 0.0
    %117 = vmatpush2.msra.mxu0 0.0
    %118 = vmatprep.mubr.f32.mxu0 0.0
    %119 = vmatmul.mubr.f32.gmra.mxu0 %v52
    %v120 = vpop.f32.mrf.mxu0
    %v121 = vadd.f32 %v48, %v120
    %v122 = vpop.f32.mrf.mxu0
    %v123 = vadd.f32 %v48, %v122
    %124 = vdwg.mxu0
    %125 = vmatprep.subr.mxu0 0.0
    %126 = vmatpush1.msra.mxu0 0.0
    %127 = vmatprep.subr.mxu0 0.0
    %128 = vmatpush1.msra.mxu0 0.0
    %129 = vmatprep.subr.mxu0 0.0
    %130 = vmatpush1.msra.mxu0 0.0
    %131 = vmatprep.subr.mxu0 0.0
    %132 = vmatpush1.msra.mxu0 0.0
    %133 = vmatprep.subr.mxu0 0.0
    %134 = vmatpush1.msra.mxu0 0.0
    %135 = vmatprep.subr.mxu0 0.0
    %136 = vmatpush1.msra.mxu0 0.0
    %137 = vmatprep.subr.mxu0 0.0
    %138 = vmatpush1.msra.mxu0 0.0
    %139 = vmatprep.subr.mxu0 0.0
    %140 = vmatpush1.msra.mxu0 0.0
    %141 = vmatprep.subr.mxu0 0.0
    %142 = vmatpush1.msra.mxu0 0.0
    %143 = vmatprep.subr.mxu0 0.0
    %144 = vmatpush1.msra.mxu0 0.0
    %145 = vmatprep.subr.mxu0 0.0
    %146 = vmatpush1.msra.mxu0 0.0
    %147 = vmatprep.subr.mxu0 0.0
    %148 = vmatpush1.msra.mxu0 0.0
    %149 = vmatprep.subr.mxu0 0.0
    %150 = vmatpush1.msra.mxu0 0.0
    %151 = vmatprep.subr.mxu0 0.0
    %152 = vmatpush1.msra.mxu0 0.0
    %153 = vmatprep.subr.mxu0 0.0
    %154 = vmatpush1.msra.mxu0 0.0
    %155 = vmatprep.subr.mxu0 %v42
    %156 = vmatpush1.msra.mxu0 %v40
    %157 = vmatprep.subr.mxu0 0.0
    %158 = vmatpush2.msra.mxu0 0.0
    %159 = vmatprep.subr.mxu0 0.0
    %160 = vmatpush2.msra.mxu0 0.0
    %161 = vmatprep.subr.mxu0 0.0
    %162 = vmatpush2.msra.mxu0 0.0
    %163 = vmatprep.subr.mxu0 0.0
    %164 = vmatpush2.msra.mxu0 0.0
    %165 = vmatprep.subr.mxu0 0.0
    %166 = vmatpush2.msra.mxu0 0.0
    %167 = vmatprep.subr.mxu0 0.0
    %168 = vmatpush2.msra.mxu0 0.0
    %169 = vmatprep.subr.mxu0 0.0
    %170 = vmatpush2.msra.mxu0 0.0
    %171 = vmatprep.subr.mxu0 0.0
    %172 = vmatpush2.msra.mxu0 0.0
    %173 = vmatprep.subr.mxu0 0.0
    %174 = vmatpush2.msra.mxu0 0.0
    %175 = vmatprep.subr.mxu0 0.0
    %176 = vmatpush2.msra.mxu0 0.0
    %177 = vmatprep.subr.mxu0 0.0
    %178 = vmatpush2.msra.mxu0 0.0
    %179 = vmatprep.subr.mxu0 0.0
    %180 = vmatpush2.msra.mxu0 0.0
    %181 = vmatprep.subr.mxu0 0.0
    %182 = vmatpush2.msra.mxu0 0.0
    %183 = vmatprep.subr.mxu0 0.0
    %184 = vmatpush2.msra.mxu0 0.0
    %185 = vmatprep.subr.mxu0 0.0
    %186 = vmatpush2.msra.mxu0 0.0
    %187 = vmatprep.subr.mxu0 0.0
    %188 = vmatpush2.msra.mxu0 0.0
    %189 = vmatprep.mubr.f32.mxu0 0.0
    %190 = vmatmul.mubr.f32.gmra.mxu0 %v52
    %v191 = vpop.f32.mrf.mxu0
    %v192 = vadd.f32 %v48, %v191
    %v193 = vpop.f32.mrf.mxu0
    %v194 = vadd.f32 %v48, %v193
    %195 = vdwg.mxu0
    %v196 = vmax.f32 %v121, 0.0
    %v197 = vmax.f32 %v123, 0.0
    %v198 = vmax.f32 %v192, 0.0
    %v199 = vmax.f32 %v194, 0.0
    %200 = vrot.lane.b32.xlu0 %v196, 1
    %v201 = vpop.permute.xlu0 %200
    %202 = vrot.lane.b32.xlu0 %v197, 1
    %v203 = vpop.permute.xlu0 %202
    %204 = vrot.lane.b32.xlu0 %v198, 1
    %v205 = vpop.permute.xlu0 %204
    %206 = vrot.lane.b32.xlu0 %v199, 1
    %v207 = vpop.permute.xlu0 %206
    %v208 = vlaneseq
    %v209 = vand.u32 %v208, 127
    %vm210 = vcmp.lt.s32.totalorder %v209, 1
    %v211 = vsel %vm210, %v205, %v207
    %v212 = vsel %vm210, %v203, %v205
    %v213 = vsel %vm210, %v201, %v203
    %v214 = vsel %vm210, %v207, %v201
    %v215 = vld [vmem:[%s1] ss:$2 sm:$0xf]
    %v217 = vlaneseq
    %v218 = vshrl.u32 %v217, 7
    %v219 = vsub.s32 0, %v218
    %v220 = vrot.slane %v215, %v219
    %v221 = vlaneseq
    %v222 = vshrl.u32 %v221, 7
    %v223 = vsub.s32 1, %v222
    %v224 = vrot.slane %v215, %v223
    %v225 = vlaneseq
    %v226 = vshrl.u32 %v225, 7
    %v227 = vsub.s32 2, %v226
    %v228 = vrot.slane %v215, %v227
    %v229 = vlaneseq
    %v230 = vshrl.u32 %v229, 7
    %v231 = vsub.s32 3, %v230
    %v232 = vrot.slane %v215, %v231
    %v237 = vmul.f32 %v214, %v220
    %v238 = vmul.f32 %v213, %v224
    %v239 = vmul.f32 %v212, %v228
    %v240 = vmul.f32 %v211, %v232
    %241 = vrot.lane.b32.xlu0 %v196, 127
    %v242 = vpop.permute.xlu0 %241
    %243 = vrot.lane.b32.xlu0 %v197, 127
    %v244 = vpop.permute.xlu0 %243
    %245 = vrot.lane.b32.xlu0 %v198, 127
    %v246 = vpop.permute.xlu0 %245
    %247 = vrot.lane.b32.xlu0 %v199, 127
    %v248 = vpop.permute.xlu0 %247
    %vm249 = vcmp.lt.s32.totalorder %v209, 127
    %v250 = vsel %vm249, %v246, %v248
    %v251 = vsel %vm249, %v244, %v246
    %v252 = vsel %vm249, %v242, %v244
    %v253 = vsel %vm249, %v248, %v242
    %s254 = scalar_lea.vmem %s1, 1
    %v255 = vld [vmem:[%s254] ss:$2 sm:$0xf]
    %v257 = vlaneseq
    %v258 = vshrl.u32 %v257, 7
    %v259 = vsub.s32 0, %v258
    %v260 = vrot.slane %v255, %v259
    %v261 = vlaneseq
    %v262 = vshrl.u32 %v261, 7
    %v263 = vsub.s32 1, %v262
    %v264 = vrot.slane %v255, %v263
    %v265 = vlaneseq
    %v266 = vshrl.u32 %v265, 7
    %v267 = vsub.s32 2, %v266
    %v268 = vrot.slane %v255, %v267
    %v269 = vlaneseq
    %v270 = vshrl.u32 %v269, 7
    %v271 = vsub.s32 3, %v270
    %v272 = vrot.slane %v255, %v271
    %v277 = vmul.f32 %v252, %v260
    %v278 = vmul.f32 %v251, %v264
    %v279 = vmul.f32 %v250, %v268
    %v280 = vmul.f32 %v253, %v272
    %v281 = vld [vmem:[%s4] sm:$0xff]
    %v282 = vld [vmem:[%s5] sm:$0xff]
    %284 = vset.pattern.permute.xlu0 0
    %285 = vperm.xlu0 %284, %v282
    %v286 = vpop.permute.xlu0 %285
    %vm288 = vcmask 195584
    %v290 = vsel %vm288, %v281, 0
    %292 = vmatprep.subr.mxu0 0.0
    %293 = vmatpush1.msra.mxu0 0.0
    %294 = vmatprep.subr.mxu0 0.0
    %295 = vmatpush1.msra.mxu0 0.0
    %296 = vmatprep.subr.mxu0 0.0
    %297 = vmatpush1.msra.mxu0 0.0
    %298 = vmatprep.subr.mxu0 0.0
    %299 = vmatpush1.msra.mxu0 0.0
    %300 = vmatprep.subr.mxu0 0.0
    %301 = vmatpush1.msra.mxu0 0.0
    %302 = vmatprep.subr.mxu0 0.0
    %303 = vmatpush1.msra.mxu0 0.0
    %304 = vmatprep.subr.mxu0 0.0
    %305 = vmatpush1.msra.mxu0 0.0
    %306 = vmatprep.subr.mxu0 0.0
    %307 = vmatpush1.msra.mxu0 0.0
    %308 = vmatprep.subr.mxu0 0.0
    %309 = vmatpush1.msra.mxu0 0.0
    %310 = vmatprep.subr.mxu0 0.0
    %311 = vmatpush1.msra.mxu0 0.0
    %312 = vmatprep.subr.mxu0 0.0
    %313 = vmatpush1.msra.mxu0 0.0
    %314 = vmatprep.subr.mxu0 0.0
    %315 = vmatpush1.msra.mxu0 0.0
    %316 = vmatprep.subr.mxu0 0.0
    %317 = vmatpush1.msra.mxu0 0.0
    %318 = vmatprep.subr.mxu0 %v278
    %319 = vmatpush1.msra.mxu0 %v277
    %320 = vmatprep.subr.mxu0 %v197
    %321 = vmatpush1.msra.mxu0 %v196
    %322 = vmatprep.subr.mxu0 %v238
    %323 = vmatpush1.msra.mxu0 %v237
    %324 = vmatprep.subr.mxu0 0.0
    %325 = vmatpush2.msra.mxu0 0.0
    %326 = vmatprep.subr.mxu0 0.0
    %327 = vmatpush2.msra.mxu0 0.0
    %328 = vmatprep.subr.mxu0 0.0
    %329 = vmatpush2.msra.mxu0 0.0
    %330 = vmatprep.subr.mxu0 0.0
    %331 = vmatpush2.msra.mxu0 0.0
    %332 = vmatprep.subr.mxu0 0.0
    %333 = vmatpush2.msra.mxu0 0.0
    %334 = vmatprep.subr.mxu0 0.0
    %335 = vmatpush2.msra.mxu0 0.0
    %336 = vmatprep.subr.mxu0 0.0
    %337 = vmatpush2.msra.mxu0 0.0
    %338 = vmatprep.subr.mxu0 0.0
    %339 = vmatpush2.msra.mxu0 0.0
    %340 = vmatprep.subr.mxu0 0.0
    %341 = vmatpush2.msra.mxu0 0.0
    %342 = vmatprep.subr.mxu0 0.0
    %343 = vmatpush2.msra.mxu0 0.0
    %344 = vmatprep.subr.mxu0 0.0
    %345 = vmatpush2.msra.mxu0 0.0
    %346 = vmatprep.subr.mxu0 0.0
    %347 = vmatpush2.msra.mxu0 0.0
    %348 = vmatprep.subr.mxu0 0.0
    %349 = vmatpush2.msra.mxu0 0.0
    %350 = vmatprep.subr.mxu0 0.0
    %351 = vmatpush2.msra.mxu0 0.0
    %352 = vmatprep.subr.mxu0 0.0
    %353 = vmatpush2.msra.mxu0 0.0
    %354 = vmatprep.subr.mxu0 0.0
    %355 = vmatpush2.msra.mxu0 0.0
    %356 = vmatprep.mubr.f32.mxu0 0.0
    %357 = vmatmul.mubr.f32.gmra.mxu0 %v290
    %v358 = vpop.f32.mrf.mxu0
    %v359 = vadd.f32 %v286, %v358
    %v360 = vpop.f32.mrf.mxu0
    %v361 = vadd.f32 %v286, %v360
    %362 = vdwg.mxu0
    %363 = vmatprep.subr.mxu0 0.0
    %364 = vmatpush1.msra.mxu0 0.0
    %365 = vmatprep.subr.mxu0 0.0
    %366 = vmatpush1.msra.mxu0 0.0
    %367 = vmatprep.subr.mxu0 0.0
    %368 = vmatpush1.msra.mxu0 0.0
    %369 = vmatprep.subr.mxu0 0.0
    %370 = vmatpush1.msra.mxu0 0.0
    %371 = vmatprep.subr.mxu0 0.0
    %372 = vmatpush1.msra.mxu0 0.0
    %373 = vmatprep.subr.mxu0 0.0
    %374 = vmatpush1.msra.mxu0 0.0
    %375 = vmatprep.subr.mxu0 0.0
    %376 = vmatpush1.msra.mxu0 0.0
    %377 = vmatprep.subr.mxu0 0.0
    %378 = vmatpush1.msra.mxu0 0.0
    %379 = vmatprep.subr.mxu0 0.0
    %380 = vmatpush1.msra.mxu0 0.0
    %381 = vmatprep.subr.mxu0 0.0
    %382 = vmatpush1.msra.mxu0 0.0
    %383 = vmatprep.subr.mxu0 0.0
    %384 = vmatpush1.msra.mxu0 0.0
    %385 = vmatprep.subr.mxu0 0.0
    %386 = vmatpush1.msra.mxu0 0.0
    %387 = vmatprep.subr.mxu0 0.0
    %388 = vmatpush1.msra.mxu0 0.0
    %389 = vmatprep.subr.mxu0 %v280
    %390 = vmatpush1.msra.mxu0 %v279
    %391 = vmatprep.subr.mxu0 %v199
    %392 = vmatpush1.msra.mxu0 %v198
    %393 = vmatprep.subr.mxu0 %v240
    %394 = vmatpush1.msra.mxu0 %v239
    %395 = vmatprep.subr.mxu0 0.0
    %396 = vmatpush2.msra.mxu0 0.0
    %397 = vmatprep.subr.mxu0 0.0
    %398 = vmatpush2.msra.mxu0 0.0
    %399 = vmatprep.subr.mxu0 0.0
    %400 = vmatpush2.msra.mxu0 0.0
    %401 = vmatprep.subr.mxu0 0.0
    %402 = vmatpush2.msra.mxu0 0.0
    %403 = vmatprep.subr.mxu0 0.0
    %404 = vmatpush2.msra.mxu0 0.0
    %405 = vmatprep.subr.mxu0 0.0
    %406 = vmatpush2.msra.mxu0 0.0
    %407 = vmatprep.subr.mxu0 0.0
    %408 = vmatpush2.msra.mxu0 0.0
    %409 = vmatprep.subr.mxu0 0.0
    %410 = vmatpush2.msra.mxu0 0.0
    %411 = vmatprep.subr.mxu0 0.0
    %412 = vmatpush2.msra.mxu0 0.0
    %413 = vmatprep.subr.mxu0 0.0
    %414 = vmatpush2.msra.mxu0 0.0
    %415 = vmatprep.subr.mxu0 0.0
    %416 = vmatpush2.msra.mxu0 0.0
    %417 = vmatprep.subr.mxu0 0.0
    %418 = vmatpush2.msra.mxu0 0.0
    %419 = vmatprep.subr.mxu0 0.0
    %420 = vmatpush2.msra.mxu0 0.0
    %421 = vmatprep.subr.mxu0 0.0
    %422 = vmatpush2.msra.mxu0 0.0
    %423 = vmatprep.subr.mxu0 0.0
    %424 = vmatpush2.msra.mxu0 0.0
    %425 = vmatprep.subr.mxu0 0.0
    %426 = vmatpush2.msra.mxu0 0.0
    %427 = vmatprep.mubr.f32.mxu0 0.0
    %428 = vmatmul.mubr.f32.gmra.mxu0 %v290
    %v429 = vpop.f32.mrf.mxu0
    %v430 = vadd.f32 %v286, %v429
    %v431 = vpop.f32.mrf.mxu0
    %v432 = vadd.f32 %v286, %v431
    %433 = vdwg.mxu0
    %v434 = vmax.f32 %v359, 0.0
    %v435 = vmax.f32 %v361, 0.0
    %v436 = vmax.f32 %v430, 0.0
    %v437 = vmax.f32 %v432, 0.0
    %v438 = vld [vmem:[%s6] sm:$0xff]
    %v439 = vld [vmem:[%s6 + $0x8] sm:$0xff]
    %v440 = vld [vmem:[%s6 + $0x10] sm:$0xff]
    %v441 = vld [vmem:[%s6 + $0x18] sm:$0xff]
    %v442 = vld [vmem:[%s7] sm:$0xff]
    %v443 = vld [vmem:[%s7 + $0x8] sm:$0xff]
    %v444 = vld [vmem:[%s7 + $0x10] sm:$0xff]
    %v445 = vld [vmem:[%s7 + $0x18] sm:$0xff]
    %447 = vset.pattern.permute.xlu0 0
    %448 = vperm.xlu0 %447, %v442
    %v449 = vpop.permute.xlu0 %448
    %452 = vset.pattern.permute.xlu0 0
    %453 = vperm.xlu0 %452, %v443
    %v454 = vpop.permute.xlu0 %453
    %457 = vset.pattern.permute.xlu0 0
    %458 = vperm.xlu0 %457, %v444
    %v459 = vpop.permute.xlu0 %458
    %462 = vset.pattern.permute.xlu0 0
    %463 = vperm.xlu0 %462, %v445
    %v464 = vpop.permute.xlu0 %463
    %v467 = vsel %vm50, %v438, 0
    %v470 = vsel %vm50, %v439, 0
    %v473 = vsel %vm50, %v440, 0
    %v476 = vsel %vm50, %v441, 0
    %478 = vmatprep.subr.mxu0 0.0
    %479 = vmatpush1.msra.mxu0 0.0
    %480 = vmatprep.subr.mxu0 0.0
    %481 = vmatpush1.msra.mxu0 0.0
    %482 = vmatprep.subr.mxu0 0.0
    %483 = vmatpush1.msra.mxu0 0.0
    %484 = vmatprep.subr.mxu0 0.0
    %485 = vmatpush1.msra.mxu0 0.0
    %486 = vmatprep.subr.mxu0 0.0
    %487 = vmatpush1.msra.mxu0 0.0
    %488 = vmatprep.subr.mxu0 0.0
    %489 = vmatpush1.msra.mxu0 0.0
    %490 = vmatprep.subr.mxu0 0.0
    %491 = vmatpush1.msra.mxu0 0.0
    %492 = vmatprep.subr.mxu0 0.0
    %493 = vmatpush1.msra.mxu0 0.0
    %494 = vmatprep.subr.mxu0 0.0
    %495 = vmatpush1.msra.mxu0 0.0
    %496 = vmatprep.subr.mxu0 0.0
    %497 = vmatpush1.msra.mxu0 0.0
    %498 = vmatprep.subr.mxu0 0.0
    %499 = vmatpush1.msra.mxu0 0.0
    %500 = vmatprep.subr.mxu0 0.0
    %501 = vmatpush1.msra.mxu0 0.0
    %502 = vmatprep.subr.mxu0 0.0
    %503 = vmatpush1.msra.mxu0 0.0
    %504 = vmatprep.subr.mxu0 0.0
    %505 = vmatpush1.msra.mxu0 0.0
    %506 = vmatprep.subr.mxu0 0.0
    %507 = vmatpush1.msra.mxu0 0.0
    %508 = vmatprep.subr.mxu0 %v435
    %509 = vmatpush1.msra.mxu0 %v434
    %510 = vmatprep.subr.mxu0 0.0
    %511 = vmatpush2.msra.mxu0 0.0
    %512 = vmatprep.subr.mxu0 0.0
    %513 = vmatpush2.msra.mxu0 0.0
    %514 = vmatprep.subr.mxu0 0.0
    %515 = vmatpush2.msra.mxu0 0.0
    %516 = vmatprep.subr.mxu0 0.0
    %517 = vmatpush2.msra.mxu0 0.0
    %518 = vmatprep.subr.mxu0 0.0
    %519 = vmatpush2.msra.mxu0 0.0
    %520 = vmatprep.subr.mxu0 0.0
    %521 = vmatpush2.msra.mxu0 0.0
    %522 = vmatprep.subr.mxu0 0.0
    %523 = vmatpush2.msra.mxu0 0.0
    %524 = vmatprep.subr.mxu0 0.0
    %525 = vmatpush2.msra.mxu0 0.0
    %526 = vmatprep.subr.mxu0 0.0
    %527 = vmatpush2.msra.mxu0 0.0
    %528 = vmatprep.subr.mxu0 0.0
    %529 = vmatpush2.msra.mxu0 0.0
    %530 = vmatprep.subr.mxu0 0.0
    %531 = vmatpush2.msra.mxu0 0.0
    %532 = vmatprep.subr.mxu0 0.0
    %533 = vmatpush2.msra.mxu0 0.0
    %534 = vmatprep.subr.mxu0 0.0
    %535 = vmatpush2.msra.mxu0 0.0
    %536 = vmatprep.subr.mxu0 0.0
    %537 = vmatpush2.msra.mxu0 0.0
    %538 = vmatprep.subr.mxu0 0.0
    %539 = vmatpush2.msra.mxu0 0.0
    %540 = vmatprep.subr.mxu0 0.0
    %541 = vmatpush2.msra.mxu0 0.0
    %542 = vmatprep.mubr.f32.mxu0 0.0
    %543 = vmatmul.mubr.f32.gmra.mxu0 %v467
    %v544 = vpop.f32.mrf.mxu0
    %v545 = vadd.f32 %v449, %v544
    %v546 = vpop.f32.mrf.mxu0
    %v547 = vadd.f32 %v449, %v546
    %548 = vmatprep.mubr.f32.mxu0 0.0
    %549 = vmatmul.mubr.f32.gmra.mxu0 %v470
    %v550 = vpop.f32.mrf.mxu0
    %v551 = vadd.f32 %v454, %v550
    %v552 = vpop.f32.mrf.mxu0
    %v553 = vadd.f32 %v454, %v552
    %554 = vmatprep.mubr.f32.mxu0 0.0
    %555 = vmatmul.mubr.f32.gmra.mxu0 %v473
    %v556 = vpop.f32.mrf.mxu0
    %v557 = vadd.f32 %v459, %v556
    %v558 = vpop.f32.mrf.mxu0
    %v559 = vadd.f32 %v459, %v558
    %560 = vmatprep.mubr.f32.mxu0 0.0
    %561 = vmatmul.mubr.f32.gmra.mxu0 %v476
    %v562 = vpop.f32.mrf.mxu0
    %v563 = vadd.f32 %v464, %v562
    %v564 = vpop.f32.mrf.mxu0
    %v565 = vadd.f32 %v464, %v564
    %566 = vdwg.mxu0
    %567 = vmatprep.subr.mxu0 0.0
    %568 = vmatpush1.msra.mxu0 0.0
    %569 = vmatprep.subr.mxu0 0.0
    %570 = vmatpush1.msra.mxu0 0.0
    %571 = vmatprep.subr.mxu0 0.0
    %572 = vmatpush1.msra.mxu0 0.0
    %573 = vmatprep.subr.mxu0 0.0
    %574 = vmatpush1.msra.mxu0 0.0
    %575 = vmatprep.subr.mxu0 0.0
    %576 = vmatpush1.msra.mxu0 0.0
    %577 = vmatprep.subr.mxu0 0.0
    %578 = vmatpush1.msra.mxu0 0.0
    %579 = vmatprep.subr.mxu0 0.0
    %580 = vmatpush1.msra.mxu0 0.0
    %581 = vmatprep.subr.mxu0 0.0
    %582 = vmatpush1.msra.mxu0 0.0
    %583 = vmatprep.subr.mxu0 0.0
    %584 = vmatpush1.msra.mxu0 0.0
    %585 = vmatprep.subr.mxu0 0.0
    %586 = vmatpush1.msra.mxu0 0.0
    %587 = vmatprep.subr.mxu0 0.0
    %588 = vmatpush1.msra.mxu0 0.0
    %589 = vmatprep.subr.mxu0 0.0
    %590 = vmatpush1.msra.mxu0 0.0
    %591 = vmatprep.subr.mxu0 0.0
    %592 = vmatpush1.msra.mxu0 0.0
    %593 = vmatprep.subr.mxu0 0.0
    %594 = vmatpush1.msra.mxu0 0.0
    %595 = vmatprep.subr.mxu0 0.0
    %596 = vmatpush1.msra.mxu0 0.0
    %597 = vmatprep.subr.mxu0 %v437
    %598 = vmatpush1.msra.mxu0 %v436
    %599 = vmatprep.subr.mxu0 0.0
    %600 = vmatpush2.msra.mxu0 0.0
    %601 = vmatprep.subr.mxu0 0.0
    %602 = vmatpush2.msra.mxu0 0.0
    %603 = vmatprep.subr.mxu0 0.0
    %604 = vmatpush2.msra.mxu0 0.0
    %605 = vmatprep.subr.mxu0 0.0
    %606 = vmatpush2.msra.mxu0 0.0
    %607 = vmatprep.subr.mxu0 0.0
    %608 = vmatpush2.msra.mxu0 0.0
    %609 = vmatprep.subr.mxu0 0.0
    %610 = vmatpush2.msra.mxu0 0.0
    %611 = vmatprep.subr.mxu0 0.0
    %612 = vmatpush2.msra.mxu0 0.0
    %613 = vmatprep.subr.mxu0 0.0
    %614 = vmatpush2.msra.mxu0 0.0
    %615 = vmatprep.subr.mxu0 0.0
    %616 = vmatpush2.msra.mxu0 0.0
    %617 = vmatprep.subr.mxu0 0.0
    %618 = vmatpush2.msra.mxu0 0.0
    %619 = vmatprep.subr.mxu0 0.0
    %620 = vmatpush2.msra.mxu0 0.0
    %621 = vmatprep.subr.mxu0 0.0
    %622 = vmatpush2.msra.mxu0 0.0
    %623 = vmatprep.subr.mxu0 0.0
    %624 = vmatpush2.msra.mxu0 0.0
    %625 = vmatprep.subr.mxu0 0.0
    %626 = vmatpush2.msra.mxu0 0.0
    %627 = vmatprep.subr.mxu0 0.0
    %628 = vmatpush2.msra.mxu0 0.0
    %629 = vmatprep.subr.mxu0 0.0
    %630 = vmatpush2.msra.mxu0 0.0
    %631 = vmatprep.mubr.f32.mxu0 0.0
    %632 = vmatmul.mubr.f32.gmra.mxu0 %v467
    %v633 = vpop.f32.mrf.mxu0
    %v634 = vadd.f32 %v449, %v633
    %v635 = vpop.f32.mrf.mxu0
    %v636 = vadd.f32 %v449, %v635
    %637 = vmatprep.mubr.f32.mxu0 0.0
    %638 = vmatmul.mubr.f32.gmra.mxu0 %v470
    %v639 = vpop.f32.mrf.mxu0
    %v640 = vadd.f32 %v454, %v639
    %v641 = vpop.f32.mrf.mxu0
    %v642 = vadd.f32 %v454, %v641
    %643 = vmatprep.mubr.f32.mxu0 0.0
    %644 = vmatmul.mubr.f32.gmra.mxu0 %v473
    %v645 = vpop.f32.mrf.mxu0
    %v646 = vadd.f32 %v459, %v645
    %v647 = vpop.f32.mrf.mxu0
    %v648 = vadd.f32 %v459, %v647
    %649 = vmatprep.mubr.f32.mxu0 0.0
    %650 = vmatmul.mubr.f32.gmra.mxu0 %v476
    %v651 = vpop.f32.mrf.mxu0
    %v652 = vadd.f32 %v464, %v651
    %v653 = vpop.f32.mrf.mxu0
    %v654 = vadd.f32 %v464, %v653
    %655 = vdwg.mxu0
    %v656 = vld [vmem:[%s8] sm:$0xff]
    %v657 = vld [vmem:[%s8 + $0x8] sm:$0xff]
    %v658 = vld [vmem:[%s8 + $0x10] sm:$0xff]
    %v659 = vld [vmem:[%s8 + $0x18] sm:$0xff]
    %v660 = vld [vmem:[%s9] sm:$0xff]
    %v661 = vld [vmem:[%s9 + $0x8] sm:$0xff]
    %v662 = vld [vmem:[%s9 + $0x10] sm:$0xff]
    %v663 = vld [vmem:[%s9 + $0x18] sm:$0xff]
    %665 = vset.pattern.permute.xlu0 0
    %666 = vperm.xlu0 %665, %v660
    %v667 = vpop.permute.xlu0 %666
    %670 = vset.pattern.permute.xlu0 0
    %671 = vperm.xlu0 %670, %v661
    %v672 = vpop.permute.xlu0 %671
    %675 = vset.pattern.permute.xlu0 0
    %676 = vperm.xlu0 %675, %v662
    %v677 = vpop.permute.xlu0 %676
    %680 = vset.pattern.permute.xlu0 0
    %681 = vperm.xlu0 %680, %v663
    %v682 = vpop.permute.xlu0 %681
    %v685 = vsel %vm50, %v656, 0
    %v688 = vsel %vm50, %v657, 0
    %v691 = vsel %vm50, %v658, 0
    %v694 = vsel %vm50, %v659, 0
    %696 = vmatprep.subr.mxu0 0.0
    %697 = vmatpush1.msra.mxu0 0.0
    %698 = vmatprep.subr.mxu0 0.0
    %699 = vmatpush1.msra.mxu0 0.0
    %700 = vmatprep.subr.mxu0 0.0
    %701 = vmatpush1.msra.mxu0 0.0
    %702 = vmatprep.subr.mxu0 0.0
    %703 = vmatpush1.msra.mxu0 0.0
    %704 = vmatprep.subr.mxu0 0.0
    %705 = vmatpush1.msra.mxu0 0.0
    %706 = vmatprep.subr.mxu0 0.0
    %707 = vmatpush1.msra.mxu0 0.0
    %708 = vmatprep.subr.mxu0 0.0
    %709 = vmatpush1.msra.mxu0 0.0
    %710 = vmatprep.subr.mxu0 0.0
    %711 = vmatpush1.msra.mxu0 0.0
    %712 = vmatprep.subr.mxu0 0.0
    %713 = vmatpush1.msra.mxu0 0.0
    %714 = vmatprep.subr.mxu0 0.0
    %715 = vmatpush1.msra.mxu0 0.0
    %716 = vmatprep.subr.mxu0 0.0
    %717 = vmatpush1.msra.mxu0 0.0
    %718 = vmatprep.subr.mxu0 0.0
    %719 = vmatpush1.msra.mxu0 0.0
    %720 = vmatprep.subr.mxu0 0.0
    %721 = vmatpush1.msra.mxu0 0.0
    %722 = vmatprep.subr.mxu0 0.0
    %723 = vmatpush1.msra.mxu0 0.0
    %724 = vmatprep.subr.mxu0 0.0
    %725 = vmatpush1.msra.mxu0 0.0
    %726 = vmatprep.subr.mxu0 %v38
    %727 = vmatpush1.msra.mxu0 %v36
    %728 = vmatprep.subr.mxu0 0.0
    %729 = vmatpush2.msra.mxu0 0.0
    %730 = vmatprep.subr.mxu0 0.0
    %731 = vmatpush2.msra.mxu0 0.0
    %732 = vmatprep.subr.mxu0 0.0
    %733 = vmatpush2.msra.mxu0 0.0
    %734 = vmatprep.subr.mxu0 0.0
    %735 = vmatpush2.msra.mxu0 0.0
    %736 = vmatprep.subr.mxu0 0.0
    %737 = vmatpush2.msra.mxu0 0.0
    %738 = vmatprep.subr.mxu0 0.0
    %739 = vmatpush2.msra.mxu0 0.0
    %740 = vmatprep.subr.mxu0 0.0
    %741 = vmatpush2.msra.mxu0 0.0
    %742 = vmatprep.subr.mxu0 0.0
    %743 = vmatpush2.msra.mxu0 0.0
    %744 = vmatprep.subr.mxu0 0.0
    %745 = vmatpush2.msra.mxu0 0.0
    %746 = vmatprep.subr.mxu0 0.0
    %747 = vmatpush2.msra.mxu0 0.0
    %748 = vmatprep.subr.mxu0 0.0
    %749 = vmatpush2.msra.mxu0 0.0
    %750 = vmatprep.subr.mxu0 0.0
    %751 = vmatpush2.msra.mxu0 0.0
    %752 = vmatprep.subr.mxu0 0.0
    %753 = vmatpush2.msra.mxu0 0.0
    %754 = vmatprep.subr.mxu0 0.0
    %755 = vmatpush2.msra.mxu0 0.0
    %756 = vmatprep.subr.mxu0 0.0
    %757 = vmatpush2.msra.mxu0 0.0
    %758 = vmatprep.subr.mxu0 0.0
    %759 = vmatpush2.msra.mxu0 0.0
    %760 = vmatprep.mubr.f32.mxu0 0.0
    %761 = vmatmul.mubr.f32.gmra.mxu0 %v685
    %v762 = vpop.f32.mrf.mxu0
    %v763 = vadd.f32 %v667, %v762
    %v764 = vpop.f32.mrf.mxu0
    %v765 = vadd.f32 %v667, %v764
    %766 = vmatprep.mubr.f32.mxu0 0.0
    %767 = vmatmul.mubr.f32.gmra.mxu0 %v688
    %v768 = vpop.f32.mrf.mxu0
    %v769 = vadd.f32 %v672, %v768
    %v770 = vpop.f32.mrf.mxu0
    %v771 = vadd.f32 %v672, %v770
    %772 = vmatprep.mubr.f32.mxu0 0.0
    %773 = vmatmul.mubr.f32.gmra.mxu0 %v691
    %v774 = vpop.f32.mrf.mxu0
    %v775 = vadd.f32 %v677, %v774
    %v776 = vpop.f32.mrf.mxu0
    %v777 = vadd.f32 %v677, %v776
    %778 = vmatprep.mubr.f32.mxu0 0.0
    %779 = vmatmul.mubr.f32.gmra.mxu0 %v694
    %v780 = vpop.f32.mrf.mxu0
    %v781 = vadd.f32 %v682, %v780
    %v782 = vpop.f32.mrf.mxu0
    %v783 = vadd.f32 %v682, %v782
    %784 = vdwg.mxu0
    %785 = vmatprep.subr.mxu0 0.0
    %786 = vmatpush1.msra.mxu0 0.0
    %787 = vmatprep.subr.mxu0 0.0
    %788 = vmatpush1.msra.mxu0 0.0
    %789 = vmatprep.subr.mxu0 0.0
    %790 = vmatpush1.msra.mxu0 0.0
    %791 = vmatprep.subr.mxu0 0.0
    %792 = vmatpush1.msra.mxu0 0.0
    %793 = vmatprep.subr.mxu0 0.0
    %794 = vmatpush1.msra.mxu0 0.0
    %795 = vmatprep.subr.mxu0 0.0
    %796 = vmatpush1.msra.mxu0 0.0
    %797 = vmatprep.subr.mxu0 0.0
    %798 = vmatpush1.msra.mxu0 0.0
    %799 = vmatprep.subr.mxu0 0.0
    %800 = vmatpush1.msra.mxu0 0.0
    %801 = vmatprep.subr.mxu0 0.0
    %802 = vmatpush1.msra.mxu0 0.0
    %803 = vmatprep.subr.mxu0 0.0
    %804 = vmatpush1.msra.mxu0 0.0
    %805 = vmatprep.subr.mxu0 0.0
    %806 = vmatpush1.msra.mxu0 0.0
    %807 = vmatprep.subr.mxu0 0.0
    %808 = vmatpush1.msra.mxu0 0.0
    %809 = vmatprep.subr.mxu0 0.0
    %810 = vmatpush1.msra.mxu0 0.0
    %811 = vmatprep.subr.mxu0 0.0
    %812 = vmatpush1.msra.mxu0 0.0
    %813 = vmatprep.subr.mxu0 0.0
    %814 = vmatpush1.msra.mxu0 0.0
    %815 = vmatprep.subr.mxu0 %v42
    %816 = vmatpush1.msra.mxu0 %v40
    %817 = vmatprep.subr.mxu0 0.0
    %818 = vmatpush2.msra.mxu0 0.0
    %819 = vmatprep.subr.mxu0 0.0
    %820 = vmatpush2.msra.mxu0 0.0
    %821 = vmatprep.subr.mxu0 0.0
    %822 = vmatpush2.msra.mxu0 0.0
    %823 = vmatprep.subr.mxu0 0.0
    %824 = vmatpush2.msra.mxu0 0.0
    %825 = vmatprep.subr.mxu0 0.0
    %826 = vmatpush2.msra.mxu0 0.0
    %827 = vmatprep.subr.mxu0 0.0
    %828 = vmatpush2.msra.mxu0 0.0
    %829 = vmatprep.subr.mxu0 0.0
    %830 = vmatpush2.msra.mxu0 0.0
    %831 = vmatprep.subr.mxu0 0.0
    %832 = vmatpush2.msra.mxu0 0.0
    %833 = vmatprep.subr.mxu0 0.0
    %834 = vmatpush2.msra.mxu0 0.0
    %835 = vmatprep.subr.mxu0 0.0
    %836 = vmatpush2.msra.mxu0 0.0
    %837 = vmatprep.subr.mxu0 0.0
    %838 = vmatpush2.msra.mxu0 0.0
    %839 = vmatprep.subr.mxu0 0.0
    %840 = vmatpush2.msra.mxu0 0.0
    %841 = vmatprep.subr.mxu0 0.0
    %842 = vmatpush2.msra.mxu0 0.0
    %843 = vmatprep.subr.mxu0 0.0
    %844 = vmatpush2.msra.mxu0 0.0
    %845 = vmatprep.subr.mxu0 0.0
    %846 = vmatpush2.msra.mxu0 0.0
    %847 = vmatprep.subr.mxu0 0.0
    %848 = vmatpush2.msra.mxu0 0.0
    %849 = vmatprep.mubr.f32.mxu0 0.0
    %850 = vmatmul.mubr.f32.gmra.mxu0 %v685
    %v851 = vpop.f32.mrf.mxu0
    %v852 = vadd.f32 %v667, %v851
    %v853 = vpop.f32.mrf.mxu0
    %v854 = vadd.f32 %v667, %v853
    %855 = vmatprep.mubr.f32.mxu0 0.0
    %856 = vmatmul.mubr.f32.gmra.mxu0 %v688
    %v857 = vpop.f32.mrf.mxu0
    %v858 = vadd.f32 %v672, %v857
    %v859 = vpop.f32.mrf.mxu0
    %v860 = vadd.f32 %v672, %v859
    %861 = vmatprep.mubr.f32.mxu0 0.0
    %862 = vmatmul.mubr.f32.gmra.mxu0 %v691
    %v863 = vpop.f32.mrf.mxu0
    %v864 = vadd.f32 %v677, %v863
    %v865 = vpop.f32.mrf.mxu0
    %v866 = vadd.f32 %v677, %v865
    %867 = vmatprep.mubr.f32.mxu0 0.0
    %868 = vmatmul.mubr.f32.gmra.mxu0 %v694
    %v869 = vpop.f32.mrf.mxu0
    %v870 = vadd.f32 %v682, %v869
    %v871 = vpop.f32.mrf.mxu0
    %v872 = vadd.f32 %v682, %v871
    %873 = vdwg.mxu0
    %v874 = vadd.f32 %v545, %v763
    %v875 = vadd.f32 %v547, %v765
    %v876 = vadd.f32 %v634, %v852
    %v877 = vadd.f32 %v636, %v854
    %v878 = vadd.f32 %v551, %v769
    %v879 = vadd.f32 %v553, %v771
    %v880 = vadd.f32 %v640, %v858
    %v881 = vadd.f32 %v642, %v860
    %v882 = vadd.f32 %v557, %v775
    %v883 = vadd.f32 %v559, %v777
    %v884 = vadd.f32 %v646, %v864
    %v885 = vadd.f32 %v648, %v866
    %v886 = vadd.f32 %v563, %v781
    %v887 = vadd.f32 %v565, %v783
    %v888 = vadd.f32 %v652, %v870
    %v889 = vadd.f32 %v654, %v872
    %v890 = vmax.f32 %v874, 0.0
    %v891 = vmax.f32 %v875, 0.0
    %v892 = vmax.f32 %v876, 0.0
    %v893 = vmax.f32 %v877, 0.0
    %v894 = vmax.f32 %v878, 0.0
    %v895 = vmax.f32 %v879, 0.0
    %v896 = vmax.f32 %v880, 0.0
    %v897 = vmax.f32 %v881, 0.0
    %v898 = vmax.f32 %v882, 0.0
    %v899 = vmax.f32 %v883, 0.0
    %v900 = vmax.f32 %v884, 0.0
    %v901 = vmax.f32 %v885, 0.0
    %v902 = vmax.f32 %v886, 0.0
    %v903 = vmax.f32 %v887, 0.0
    %v904 = vmax.f32 %v888, 0.0
    %v905 = vmax.f32 %v889, 0.0
    %906 = vst [vmem:[#allocation2] sm:$0xff] %v890
    %907 = vst [vmem:[#allocation2 + $0x8] sm:$0xff] %v894
    %908 = vst [vmem:[#allocation2 + $0x10] sm:$0xff] %v898
    %909 = vst [vmem:[#allocation2 + $0x18] sm:$0xff] %v902
    %s910 = scalar_lea.vmem [#allocation2], 32
    %911 = vst [vmem:[%s910] sm:$0xff] %v891
    %912 = vst [vmem:[%s910 + $0x8] sm:$0xff] %v895
    %913 = vst [vmem:[%s910 + $0x10] sm:$0xff] %v899
    %914 = vst [vmem:[%s910 + $0x18] sm:$0xff] %v903
    %s915 = scalar_lea.vmem [#allocation2], 64
    %916 = vst [vmem:[%s915] sm:$0xff] %v892
    %917 = vst [vmem:[%s915 + $0x8] sm:$0xff] %v896
    %918 = vst [vmem:[%s915 + $0x10] sm:$0xff] %v900
    %919 = vst [vmem:[%s915 + $0x18] sm:$0xff] %v904
    %s920 = scalar_lea.vmem [#allocation2], 96
    %921 = vst [vmem:[%s920] sm:$0xff] %v893
    %922 = vst [vmem:[%s920 + $0x8] sm:$0xff] %v897
    %923 = vst [vmem:[%s920 + $0x10] sm:$0xff] %v901
    %924 = vst [vmem:[%s920 + $0x18] sm:$0xff] %v905
    // Predicated region
    $region42: #{tpu_custom_call.1} parent=1 // pred_check
      _
    $region43: #{tpu_custom_call.1} parent=1 // pred_check_branch
      %926 = sbr.rel (0) target = $region45
    $region44: #{tpu_custom_call.1} parent=1 // pred_region
      %s928 = ssub.s32 2048, 2048
      %929 = vsyncadd [#allocation3], %s928
      %s930 = sshll.u32 [#allocation2], 4
      %s931 = int_to_ptr.vmem [resolvable:$true] %s930
      %936 = dma.vmem_to_hbm [thread:$0]  %s931, 2048, %s10, [#allocation3], 128, 128, 8
    $region45: #{tpu_custom_call.1} parent=1 // pred_fallthru
      _
    // Predicated region
    $region46: #{tpu_custom_call.1} parent=1 // pred_check
      _
    $region47: #{tpu_custom_call.1} parent=1 // pred_check_branch
      %938 = sbr.rel (0) target = $region49
    $region48: #{tpu_custom_call.1} parent=1 // pred_region
      %939 = dma.done [#allocation3], 2048
    $region49: #{tpu_custom_call.1} parent=1 // pred_fallthru
      _
    %940 = vsyncpa [#allocation3], 1

</llo_original>
